<compile_context>
chip_gen: v7x
topology: tpu7x:2x2x1
jax: 0.10.0
libtpu: 0.0.40
codegen_flags: <defaults>
</compile_context>

<pallas_src>
import numpy as np
import jax
import jax.numpy as jnp
from jax.experimental import pallas as pl
from jax.experimental.pallas import tpu as pltpu

LANE = 128                      # lane width: feature dims padded to multiples
TILE_M = 256                    # row tile for A_hat aggregation (schedule/parallel axis)
TILE_K = 1024                   # contraction tile for A_hat aggregation / pooling
_VMEM_LIMIT = 32 * 1024 * 1024

assert TILE_K % TILE_M == 0


def _round_up(v, m):
    return ((v + m - 1) // m) * m


def _pad_to(a, shape):
    return jnp.pad(a, [(0, s - d) for d, s in zip(a.shape, shape)])


# ----------------------------------------------------------------------------
# Pallas kernels
# ----------------------------------------------------------------------------
def _dense_rows_kernel(x_ref, w_ref, b_ref, o_ref):
    # y = x @ [W | V] + [0 | b]   (bf16 in, f32 MXU accumulate, bf16 out)
    o_ref[...] = (jnp.dot(x_ref[...], w_ref[...],
                          preferred_element_type=jnp.float32)
                  + b_ref[...]).astype(o_ref.dtype)


def _dense_rows(x, w, b):
    n_pad, f_in = x.shape
    f_out = w.shape[1]
    return pl.pallas_call(
        _dense_rows_kernel,
        grid=(n_pad // TILE_K,),
        in_specs=[pl.BlockSpec((TILE_K, f_in), lambda i: (i, 0)),
                  pl.BlockSpec((f_in, f_out), lambda i: (0, 0)),
                  pl.BlockSpec((1, f_out), lambda i: (0, 0))],
        out_specs=pl.BlockSpec((TILE_K, f_out), lambda i: (i, 0)),
        out_shape=jax.ShapeDtypeStruct((n_pad, f_out), jnp.bfloat16),
        compiler_params=pltpu.CompilerParams(
            dimension_semantics=("parallel",),
            vmem_limit_bytes=_VMEM_LIMIT),
    )(x, w, b)


def _arma_agg_kernel(k_lo_ref, k_num_ref, a_ref, xwp_ref, xwr_ref,
                     o_ref, acc_ref):
    # out = ReLU( A_hat @ (x@W) + (x@V + b) ), accumulated over k blocks.
    i = pl.program_id(0)
    kk = pl.program_id(1)

    # Initialize the accumulator with the root term (bias already folded in).
    @pl.when(kk == 0)
    def _():
        acc_ref[...] = xwr_ref[...].astype(jnp.float32)

    # Only accumulate contraction blocks inside this row-tile's nonzero column
    # window; clamped (repeated) blocks past k_num are skipped.
    @pl.when(kk < k_num_ref[i])
    def _():
        acc_ref[...] += jnp.dot(a_ref[...], xwp_ref[...],
                                preferred_element_type=jnp.float32)

    @pl.when(kk == pl.num_programs(1) - 1)
    def _():
        o_ref[...] = jnp.maximum(acc_ref[...], 0.0).astype(o_ref.dtype)


def arma_conv(a_pad, x_pad, w_fused, b_fused, k_lo, k_num, max_nk):
    """ARMAConv layer on padded, lane-dense operands (bf16 in, bf16 out)."""
    n_pad = a_pad.shape[0]
    hp = w_fused.shape[1] // 2
    n_i = n_pad // TILE_M

    # Fused per-node projection: xw = x @ [W | V] + [0 | b].
    xw = _dense_rows(x_pad, w_fused, b_fused)

    def a_map(i, k, klo, knum):
        return (i, klo[i] + jnp.minimum(k, knum[i] - 1))

    def prop_map(i, k, klo, knum):
        return (klo[i] + jnp.minimum(k, knum[i] - 1), 0)

    def root_map(i, k, klo, knum):
        return (i, 1)

    grid_spec = pltpu.PrefetchScalarGridSpec(
        num_scalar_prefetch=2,
        grid=(n_i, max_nk),
        in_specs=[
            pl.BlockSpec((TILE_M, TILE_K), a_map),    # A_hat block
            pl.BlockSpec((TILE_K, hp), prop_map),     # x @ W  (propagated half)
            pl.BlockSpec((TILE_M, hp), root_map),     # x @ V + b (root half)
        ],
        out_specs=pl.BlockSpec((TILE_M, hp), lambda i, k, klo, knum: (i, 0)),
        scratch_shapes=[pltpu.VMEM((TILE_M, hp), jnp.float32)],
    )
    return pl.pallas_call(
        _arma_agg_kernel,
        grid_spec=grid_spec,
        out_shape=jax.ShapeDtypeStruct((n_pad, hp), jnp.bfloat16),
        compiler_params=pltpu.CompilerParams(
            dimension_semantics=("parallel", "arbitrary"),
            vmem_limit_bytes=_VMEM_LIMIT),
        cost_estimate=pl.CostEstimate(
            flops=2 * n_pad * n_pad * hp,
            transcendentals=0,
            bytes_accessed=(n_pad * n_pad * 2        # bf16 A_hat
                            + 3 * n_pad * hp * 2     # bf16 projections
                            + n_pad * hp * 2)),      # bf16 output
    )(k_lo, k_num, a_pad, xw, xw)


def _pool_head_kernel(p_ref, nx_ref, w1_ref, b1_ref, w2_ref, b2_ref,
                      gx_ref, feat_ref, acc_ref):
    k = pl.program_id(0)

    @pl.when(k == 0)
    def _():
        acc_ref[...] = jnp.zeros_like(acc_ref)

    # graph_x = P @ node_x   (global mean pool, bf16 in, f32 accumulate)
    acc_ref[...] += jnp.dot(p_ref[...], nx_ref[...],
                            preferred_element_type=jnp.float32)

    @pl.when(k == pl.num_programs(0) - 1)
    def _():
        gx = acc_ref[...]
        gx_ref[...] = gx
        # head: Linear -> ReLU -> Linear
        h = jnp.maximum(
            jnp.dot(gx, w1_ref[...], preferred_element_type=jnp.float32)
            + b1_ref[...], 0.0)
        f = (jnp.dot(h, w2_ref[...], preferred_element_type=jnp.float32)
             + b2_ref[...])
        # F.normalize(f, dim=1) = f / clamp_min(||f||, 1e-12); rsqrt on the EUP
        # with the clamp applied to the squared norm (1e-24) keeps the floor.
        ss = jnp.sum(f * f, axis=1, keepdims=True)
        feat_ref[...] = f * jax.lax.rsqrt(jnp.maximum(ss, 1e-24))


def pool_and_head(p_mat, node_x, w1, b1, w2, b2):
    g, n_pad = p_mat.shape
    h_p = node_x.shape[1]
    m_p = w1.shape[1]
    fd_p = w2.shape[1]
    n_k = n_pad // TILE_K
    return pl.pallas_call(
        _pool_head_kernel,
        grid=(n_k,),
        in_specs=[
            pl.BlockSpec((g, TILE_K), lambda k: (0, k)),      # pooling matrix
            pl.BlockSpec((TILE_K, h_p), lambda k: (k, 0)),    # node features
            pl.BlockSpec((h_p, m_p), lambda k: (0, 0)),
            pl.BlockSpec((1, m_p), lambda k: (0, 0)),
            pl.BlockSpec((m_p, fd_p), lambda k: (0, 0)),
            pl.BlockSpec((1, fd_p), lambda k: (0, 0)),
        ],
        out_specs=[
            pl.BlockSpec((g, h_p), lambda k: (0, 0)),
            pl.BlockSpec((g, fd_p), lambda k: (0, 0)),
        ],
        out_shape=[
            jax.ShapeDtypeStruct((g, h_p), jnp.float32),
            jax.ShapeDtypeStruct((g, fd_p), jnp.float32),
        ],
        scratch_shapes=[pltpu.VMEM((g, h_p), jnp.float32)],
        compiler_params=pltpu.CompilerParams(
            dimension_semantics=("arbitrary",),
            vmem_limit_bytes=_VMEM_LIMIT),
    )(p_mat, node_x, w1, b1, w2, b2)


# ----------------------------------------------------------------------------
# Plain-JAX / host glue: gcn_norm adjacency, pooling matrix, block schedule
# ----------------------------------------------------------------------------
def gcn_norm_dense_padded(edge_index, edge_weight, num_nodes, n_pad):
    # PyG gcn_norm (add_self_loops=False): degree from the target column.
    # Scatter directly into the padded buffer; single bf16 cast at the end.
    row, col = edge_index[0], edge_index[1]
    deg = jnp.zeros((num_nodes,), jnp.float32).at[col].add(edge_weight)
    dinv = jnp.where(deg > 0, jax.lax.rsqrt(deg), 0.0)
    norm = dinv[row] * edge_weight * dinv[col]
    # aggregation at target i=col of source j=row: A_hat[i, j] += norm
    a = jnp.zeros((n_pad, n_pad), jnp.float32).at[col, row].add(norm)
    return a.astype(jnp.bfloat16)


def mean_pool_matrix(batch, num_graphs, num_nodes, n_pad):
    # Padded nodes map to a sentinel graph id so they never pool.
    batch_pad = jnp.pad(batch, (0, n_pad - num_nodes),
                        constant_values=num_graphs)
    onehot = (batch_pad[None, :] == jnp.arange(num_graphs)[:, None]).astype(jnp.float32)
    counts = jnp.maximum(onehot.sum(axis=1, keepdims=True), 1.0)
    return (onehot / counts).astype(jnp.bfloat16)


def _block_diag_schedule(batch, num_graphs, num_nodes, n_pad, tile_m, tile_k):
    """Per row-tile contraction-block window [k_lo, k_lo + k_num) covering
    every column of the block-diagonal batched adjacency that can be nonzero
    for the rows in that tile.  Host-side numpy glue (concrete batch)."""
    # TODO(synk): host-side schedule forces a device sync; not jit/vmap-safe
    # with a traced `batch`.
    b = np.asarray(jax.device_get(batch)).astype(np.int64)
    lo = np.full(num_graphs, num_nodes, np.int64)
    hi = np.zeros(num_graphs, np.int64)
    for g in range(num_graphs):
        idx = np.nonzero(b == g)[0]
        if idx.size:
            lo[g], hi[g] = idx.min(), idx.max() + 1
    n_i = n_pad // tile_m
    k_lo = np.zeros(n_i, np.int32)
    k_num = np.ones(n_i, np.int32)
    for i in range(n_i):
        r0, r1 = i * tile_m, min((i + 1) * tile_m, num_nodes)
        if r0 >= num_nodes:
            continue                      # all-padding rows: one (zero) block
        gs = np.unique(b[r0:r1])
        c0 = int(min(lo[g] for g in gs))
        c1 = max(int(max(hi[g] for g in gs)), c0 + 1)
        k_lo[i] = c0 // tile_k
        k_num[i] = (c1 - 1) // tile_k - k_lo[i] + 1
    return jnp.asarray(k_lo), jnp.asarray(k_num), int(k_num.max())


# ----------------------------------------------------------------------------
# GraphEncoder forward
# ----------------------------------------------------------------------------
def graph_encoder_forward(params, x, edge_index, edge_attr, batch, num_graphs):
    n, f_in = x.shape
    h_dim = params["conv0_W"].shape[1]
    m_dim = params["head_W1"].shape[1]
    f_dim = params["head_W2"].shape[1]

    n_pad = _round_up(max(n, 1), max(TILE_M, TILE_K))
    fin_p = _round_up(f_in, LANE)
    h_p = _round_up(h_dim, LANE)
    m_p = _round_up(m_dim, LANE)
    fd_p = _round_up(f_dim, LANE)

    edge_weight = edge_attr.reshape(-1)
    a_pad = gcn_norm_dense_padded(edge_index, edge_weight, n, n_pad)
    x_pad = _pad_to(x, (n_pad, fin_p)).astype(jnp.bfloat16)

    # Fused [W | V] per ARMA layer (bf16), bias folded into the V half (f32).
    wf0 = jnp.concatenate(
        [_pad_to(params["conv0_W"], (fin_p, h_p)),
         _pad_to(params["conv0_V"], (fin_p, h_p))], axis=1).astype(jnp.bfloat16)
    wf1 = jnp.concatenate(
        [_pad_to(params["conv1_W"], (h_p, h_p)),
         _pad_to(params["conv1_V"], (h_p, h_p))], axis=1).astype(jnp.bfloat16)
    bf0 = jnp.concatenate(
        [jnp.zeros((1, h_p), jnp.float32),
         _pad_to(params["conv0_b"], (1, h_p))], axis=1)
    bf1 = jnp.concatenate(
        [jnp.zeros((1, h_p), jnp.float32),
         _pad_to(params["conv1_b"], (1, h_p))], axis=1)

    # Block-diagonal schedule for the batched adjacency (scalar prefetch).
    k_lo, k_num, max_nk = _block_diag_schedule(
        batch, num_graphs, n, n_pad, TILE_M, TILE_K)

    # conv0 (ReLU inside) -> F.relu (idempotent) -> conv1 (ReLU inside)
    h = arma_conv(a_pad, x_pad, wf0, bf0, k_lo, k_num, max_nk)       # bf16
    node_x = arma_conv(a_pad, h, wf1, bf1, k_lo, k_num, max_nk)      # bf16

    # global_mean_pool -> MLP head -> L2 normalize (tiled over nodes)
    p_mat = mean_pool_matrix(batch, num_graphs, n, n_pad)            # bf16
    graph_x, feat_norm = pool_and_head(
        p_mat, node_x,
        _pad_to(params["head_W1"], (h_p, m_p)),
        _pad_to(params["head_b1"], (1, m_p)),
        _pad_to(params["head_W2"], (m_p, fd_p)),
        _pad_to(params["head_b2"], (1, fd_p)),
    )
    return graph_x[:, :h_dim], feat_norm[:, :f_dim]


def init_params(key, in_channels, hid_channels, feat_dim):
    ks = jax.random.split(key, 10)
    s = 0.1
    return {
        # ARMAConv 0: init_weight [in, hid], root_weight [in, hid], bias [1, hid]
        "conv0_W": s * jax.random.normal(ks[0], (in_channels, hid_channels), jnp.float32),
        "conv0_V": s * jax.random.normal(ks[1], (in_channels, hid_channels), jnp.float32),
        "conv0_b": s * jax.random.normal(ks[2], (1, hid_channels), jnp.float32),
        # ARMAConv 1: [hid, hid]
        "conv1_W": s * jax.random.normal(ks[3], (hid_channels, hid_channels), jnp.float32),
        "conv1_V": s * jax.random.normal(ks[4], (hid_channels, hid_channels), jnp.float32),
        "conv1_b": s * jax.random.normal(ks[5], (1, hid_channels), jnp.float32),
        # head: Linear(hid, 2*hid) -> ReLU -> Linear(2*hid, feat_dim)
        "head_W1": s * jax.random.normal(ks[6], (hid_channels, 2 * hid_channels), jnp.float32),
        "head_b1": s * jax.random.normal(ks[7], (1, 2 * hid_channels), jnp.float32),
        "head_W2": s * jax.random.normal(ks[8], (2 * hid_channels, feat_dim), jnp.float32),
        "head_b2": s * jax.random.normal(ks[9], (1, feat_dim), jnp.float32),
    }


if __name__ == "__main__":
    key = jax.random.PRNGKey(0)
    k_x, k_e, k_w, k_p = jax.random.split(key, 4)

    # Small synthetic graph batch (module defaults hid=feat=128, lane-dense).
    in_channels, hid_channels, feat_dim = 4, 128, 128
    N, E, G = 16, 32, 2

    x = jax.random.normal(k_x, (N, in_channels), jnp.float32)
    edge_index = jax.random.randint(k_e, (2, E), 0, N, dtype=jnp.int32)
    edge_attr = jax.random.uniform(k_w, (E, 1), jnp.float32, 0.5, 1.5)
    batch = jnp.concatenate([jnp.zeros(N // 2, jnp.int32),
                             jnp.ones(N - N // 2, jnp.int32)])

    params = init_params(k_p, in_channels, hid_channels, feat_dim)

    graph_x, feat_norm = graph_encoder_forward(
        params, x, edge_index, edge_attr, batch, num_graphs=G)
    jax.block_until_ready((graph_x, feat_norm))

    assert graph_x.shape == (G, hid_channels)
    assert feat_norm.shape == (G, feat_dim)
    print("KERNEL_OK")
</pallas_src>

<mosaic_0001>
module attributes {stable_mosaic.version = 11 : i64} {
  func.func @_dense_rows_kernel(%arg0: i32, %arg1: memref<1024x128xbf16, #tpu.memory_space<vmem>>, %arg2: memref<128x256xbf16, #tpu.memory_space<vmem>>, %arg3: memref<1x256xf32, #tpu.memory_space<vmem>>, %arg4: memref<1024x256xbf16, #tpu.memory_space<vmem>>) attributes {dimension_semantics = [#tpu.dimension_semantics<parallel>], iteration_bounds = array<i64: 1>, scalar_prefetch = 0 : i64, scratch_operands = 0 : i64, tpu.core_type = #tpu.core_type<tc>, window_params = [{transform_indices = @transform_0, window_bounds = array<i64: 1024, 128>}, {pipeline_mode = #tpu.pipeline_mode<synchronous>, transform_indices = @transform_1, window_bounds = array<i64: 128, 256>}, {pipeline_mode = #tpu.pipeline_mode<synchronous>, transform_indices = @transform_2, window_bounds = array<i64: 1, 256>}, {transform_indices = @transform_3, window_bounds = array<i64: 1024, 256>}]} {
    %c0 = arith.constant 0 : index
    %c0_0 = arith.constant 0 : index
    %0 = vector.load %arg1[%c0, %c0_0] : memref<1024x128xbf16, #tpu.memory_space<vmem>>, vector<1024x128xbf16>
    %c0_1 = arith.constant 0 : index
    %c0_2 = arith.constant 0 : index
    %1 = vector.load %arg2[%c0_1, %c0_2] : memref<128x256xbf16, #tpu.memory_space<vmem>>, vector<128x256xbf16>
    %cst = arith.constant dense<0.000000e+00> : vector<1024x256xf32>
    %2 = tpu.matmul %0, %1, %cst {dimension_numbers = #tpu.dot_dimension_numbers<[1], [0], [0], [1], [0, 0, 1, 1], [], []>} : vector<1024x128xbf16>, vector<128x256xbf16>, vector<1024x256xf32> -> vector<1024x256xf32>
    %c0_3 = arith.constant 0 : index
    %c0_4 = arith.constant 0 : index
    %3 = vector.load %arg3[%c0_3, %c0_4] : memref<1x256xf32, #tpu.memory_space<vmem>>, vector<1x256xf32>
    %4 = vector.broadcast %3 : vector<1x256xf32> to vector<1024x256xf32>
    %5 = arith.addf %2, %4 : vector<1024x256xf32>
    %6 = arith.truncf %5 : vector<1024x256xf32> to vector<1024x256xbf16>
    %c0_5 = arith.constant 0 : index
    %c0_6 = arith.constant 0 : index
    %7 = vector.load %arg4[%c0_5, %c0_6] : memref<1024x256xbf16, #tpu.memory_space<vmem>>, vector<1024x256xbf16>
    tpu.vector_store %arg4[%c0_5, %c0_6], %6 {strides = array<i32>} : memref<1024x256xbf16, #tpu.memory_space<vmem>>, vector<1024x256xbf16>,
    return
  }
  func.func @transform_0(%arg0: i32) -> (i32, i32) {
    %c0_i32 = arith.constant 0 : i32
    %c0_i32_0 = arith.constant 0 : i32
    return %arg0, %c0_i32 : i32, i32
  }
  func.func @transform_1(%arg0: i32) -> (i32, i32) {
    %c0_i32 = arith.constant 0 : i32
    %c0_i32_0 = arith.constant 0 : i32
    %c0_i32_1 = arith.constant 0 : i32
    return %c0_i32, %c0_i32_0 : i32, i32
  }
  func.func @transform_2(%arg0: i32) -> (i32, i32) {
    %c0_i32 = arith.constant 0 : i32
    %c0_i32_0 = arith.constant 0 : i32
    %c0_i32_1 = arith.constant 0 : i32
    return %c0_i32, %c0_i32_0 : i32, i32
  }
  func.func @transform_3(%arg0: i32) -> (i32, i32) {
    %c0_i32 = arith.constant 0 : i32
    %c0_i32_0 = arith.constant 0 : i32
    return %arg0, %c0_i32 : i32, i32
  }
}

</mosaic_0001>

<llo_original>
// kernel: tpu_custom_call.1
$region0: #{tpu_custom_call.1}
  #allocation0 [shape = 'u32[]', space=smem, size = 0x4, offset = 0x4, fixed_abs, tag = 'smem constant byte address 0x4 - core index']
  #allocation1 [shape = 'u32[144,128]{1,0:T(1,128)}', space=vmem, size = 0x12000, scoped, tag = 'internal scratch']
  %s0 = inlined_call_operand.hbm [shape: bf16[1024,128], index: 0, kind: input, shape index: {}]
  %s1 = inlined_call_operand.hbm [shape: bf16[128,256], index: 1, kind: input, shape index: {}]
  %s2 = inlined_call_operand.vmem [shape: f32[1,256], index: 2, kind: input, shape index: {}]
  %s3 = inlined_call_operand.hbm [shape: bf16[1024,256], index: 3, kind: output, shape index: {}]
  %s4 = sld [smem:[#allocation0]]
  $region30: #{tpu_custom_call.1} parent=0
    _
  %s6 = ssub.s32 1, %s4
  %s7 = scalar_select 0, %s6, %s4
  $region1: #{tpu_custom_call.1} parent=0
    #allocation2 [shape = 'u8[262144]{0}', space=vmem, size = 0x40000, scoped, tag = 'input window, operand 0, single buffered']
    #allocation3 [shape = 's32[1]{0}', space=sflag, size = 0x4, scoped, tag = 'scoped memory for tpu_custom_call.1']
    #allocation4 [shape = 's32[1]{0}', space=sflag, size = 0x4, scoped, tag = 'scoped memory for tpu_custom_call.1']
    #allocation5 [shape = 'u8[65536]{0}', space=vmem, size = 0x10000, scoped, tag = 'input window, operand 1, single buffered']
    #allocation6 [shape = 's32[1]{0}', space=sflag, size = 0x4, scoped, tag = 'scoped memory for tpu_custom_call.1']
    #allocation7 [shape = 'u8[524288]{0}', space=vmem, size = 0x80000, scoped, tag = 'output window, operand 0, single buffered']
    %8 = vsyncpa [#allocation3], 0
    %9 = vsyncpa [#allocation6], 0
    %10 = vsyncpa [#allocation4], 0
    // Predicated region
    $region2: #{tpu_custom_call.1} parent=1 // pred_check
      _
    $region3: #{tpu_custom_call.1} parent=1 // pred_check_branch
      %12 = sbr.rel (0) target = $region5
    $region4: #{tpu_custom_call.1} parent=1 // pred_region
      %s14 = ssub.s32 8192, 8192
      %15 = vsyncadd [#allocation3], %s14
      %s16 = sshll.u32 [#allocation2], 4
      %s17 = int_to_ptr.vmem [resolvable:$true] %s16
      %22 = dma.hbm_to_vmem [thread:$0]  %s0, 8192, %s17, [#allocation3], 64, 64, 4
    $region5: #{tpu_custom_call.1} parent=1 // pred_fallthru
      _
    // Predicated region
    $region6: #{tpu_custom_call.1} parent=1 // pred_check
      _
    $region7: #{tpu_custom_call.1} parent=1 // pred_check_branch
      %24 = sbr.rel (0) target = $region9
    $region8: #{tpu_custom_call.1} parent=1 // pred_region
      %s26 = ssub.s32 2048, 2048
      %27 = vsyncadd [#allocation6], %s26
      %s28 = sshll.u32 [#allocation5], 4
      %s29 = int_to_ptr.vmem [resolvable:$true] %s28
      %34 = dma.hbm_to_vmem [thread:$0]  %s1, 2048, %s29, [#allocation6], 128, 128, 8
    $region9: #{tpu_custom_call.1} parent=1 // pred_fallthru
      _
    // Predicated region
    $region10: #{tpu_custom_call.1} parent=1 // pred_check
      _
    $region11: #{tpu_custom_call.1} parent=1 // pred_check_branch
      %36 = sbr.rel (0) target = $region13
    $region12: #{tpu_custom_call.1} parent=1 // pred_region
      _
    $region13: #{tpu_custom_call.1} parent=1 // pred_fallthru
      _
    // Predicated region
    $region14: #{tpu_custom_call.1} parent=1 // pred_check
      _
    $region15: #{tpu_custom_call.1} parent=1 // pred_check_branch
      %38 = sbr.rel (0) target = $region17
    $region16: #{tpu_custom_call.1} parent=1 // pred_region
      %39 = dma.done [#allocation3], 8192
    $region17: #{tpu_custom_call.1} parent=1 // pred_fallthru
      _
    // Predicated region
    $region18: #{tpu_custom_call.1} parent=1 // pred_check
      _
    $region19: #{tpu_custom_call.1} parent=1 // pred_check_branch
      %41 = sbr.rel (0) target = $region21
    $region20: #{tpu_custom_call.1} parent=1 // pred_region
      %42 = dma.done [#allocation6], 2048
    $region21: #{tpu_custom_call.1} parent=1 // pred_fallthru
      _
    %v44 = vld [vmem:[#allocation2] sm:$0xf]
    %v45 = vld [vmem:[#allocation2 + $0x4] sm:$0xf]
    %v46 = vld [vmem:[#allocation2 + $0x8] sm:$0xf]
    %v47 = vld [vmem:[#allocation2 + $0xc] sm:$0xf]
    %v48 = vld [vmem:[#allocation2 + $0x10] sm:$0xf]
    %v49 = vld [vmem:[#allocation2 + $0x14] sm:$0xf]
    %v50 = vld [vmem:[#allocation2 + $0x18] sm:$0xf]
    %v51 = vld [vmem:[#allocation2 + $0x1c] sm:$0xf]
    %v52 = vld [vmem:[#allocation2 + $0x20] sm:$0xf]
    %v53 = vld [vmem:[#allocation2 + $0x24] sm:$0xf]
    %v54 = vld [vmem:[#allocation2 + $0x28] sm:$0xf]
    %v55 = vld [vmem:[#allocation2 + $0x2c] sm:$0xf]
    %v56 = vld [vmem:[#allocation2 + $0x30] sm:$0xf]
    %v57 = vld [vmem:[#allocation2 + $0x34] sm:$0xf]
    %v58 = vld [vmem:[#allocation2 + $0x38] sm:$0xf]
    %v59 = vld [vmem:[#allocation2 + $0x3c] sm:$0xf]
    %v60 = vld [vmem:[#allocation2 + $0x40] sm:$0xf]
    %v61 = vld [vmem:[#allocation2 + $0x44] sm:$0xf]
    %v62 = vld [vmem:[#allocation2 + $0x48] sm:$0xf]
    %v63 = vld [vmem:[#allocation2 + $0x4c] sm:$0xf]
    %v64 = vld [vmem:[#allocation2 + $0x50] sm:$0xf]
    %v65 = vld [vmem:[#allocation2 + $0x54] sm:$0xf]
    %v66 = vld [vmem:[#allocation2 + $0x58] sm:$0xf]
    %v67 = vld [vmem:[#allocation2 + $0x5c] sm:$0xf]
    %v68 = vld [vmem:[#allocation2 + $0x60] sm:$0xf]
    %v69 = vld [vmem:[#allocation2 + $0x64] sm:$0xf]
    %v70 = vld [vmem:[#allocation2 + $0x68] sm:$0xf]
    %v71 = vld [vmem:[#allocation2 + $0x6c] sm:$0xf]
    %v72 = vld [vmem:[#allocation2 + $0x70] sm:$0xf]
    %v73 = vld [vmem:[#allocation2 + $0x74] sm:$0xf]
    %v74 = vld [vmem:[#allocation2 + $0x78] sm:$0xf]
    %v75 = vld [vmem:[#allocation2 + $0x7c] sm:$0xf]
    %v76 = vld [vmem:[#allocation2 + $0x80] sm:$0xf]
    %v77 = vld [vmem:[#allocation2 + $0x84] sm:$0xf]
    %v78 = vld [vmem:[#allocation2 + $0x88] sm:$0xf]
    %v79 = vld [vmem:[#allocation2 + $0x8c] sm:$0xf]
    %v80 = vld [vmem:[#allocation2 + $0x90] sm:$0xf]
    %v81 = vld [vmem:[#allocation2 + $0x94] sm:$0xf]
    %v82 = vld [vmem:[#allocation2 + $0x98] sm:$0xf]
    %v83 = vld [vmem:[#allocation2 + $0x9c] sm:$0xf]
    %v84 = vld [vmem:[#allocation2 + $0xa0] sm:$0xf]
    %v85 = vld [vmem:[#allocation2 + $0xa4] sm:$0xf]
    %v86 = vld [vmem:[#allocation2 + $0xa8] sm:$0xf]
    %v87 = vld [vmem:[#allocation2 + $0xac] sm:$0xf]
    %v88 = vld [vmem:[#allocation2 + $0xb0] sm:$0xf]
    %v89 = vld [vmem:[#allocation2 + $0xb4] sm:$0xf]
    %v90 = vld [vmem:[#allocation2 + $0xb8] sm:$0xf]
    %v91 = vld [vmem:[#allocation2 + $0xbc] sm:$0xf]
    %v92 = vld [vmem:[#allocation2 + $0xc0] sm:$0xf]
    %v93 = vld [vmem:[#allocation2 + $0xc4] sm:$0xf]
    %v94 = vld [vmem:[#allocation2 + $0xc8] sm:$0xf]
    %v95 = vld [vmem:[#allocation2 + $0xcc] sm:$0xf]
    %v96 = vld [vmem:[#allocation2 + $0xd0] sm:$0xf]
    %v97 = vld [vmem:[#allocation2 + $0xd4] sm:$0xf]
    %v98 = vld [vmem:[#allocation2 + $0xd8] sm:$0xf]
    %v99 = vld [vmem:[#allocation2 + $0xdc] sm:$0xf]
    %v100 = vld [vmem:[#allocation2 + $0xe0] sm:$0xf]
    %v101 = vld [vmem:[#allocation2 + $0xe4] sm:$0xf]
    %v102 = vld [vmem:[#allocation2 + $0xe8] sm:$0xf]
    %v103 = vld [vmem:[#allocation2 + $0xec] sm:$0xf]
    %v104 = vld [vmem:[#allocation2 + $0xf0] sm:$0xf]
    %v105 = vld [vmem:[#allocation2 + $0xf4] sm:$0xf]
    %v106 = vld [vmem:[#allocation2 + $0xf8] sm:$0xf]
    %v107 = vld [vmem:[#allocation2 + $0xfc] sm:$0xf]
    %v108 = vld [vmem:[#allocation2 + $0x100] sm:$0xf]
    %v109 = vld [vmem:[#allocation2 + $0x104] sm:$0xf]
    %v110 = vld [vmem:[#allocation2 + $0x108] sm:$0xf]
    %v111 = vld [vmem:[#allocation2 + $0x10c] sm:$0xf]
    %v112 = vld [vmem:[#allocation2 + $0x110] sm:$0xf]
    %v113 = vld [vmem:[#allocation2 + $0x114] sm:$0xf]
    %v114 = vld [vmem:[#allocation2 + $0x118] sm:$0xf]
    %v115 = vld [vmem:[#allocation2 + $0x11c] sm:$0xf]
    %v116 = vld [vmem:[#allocation2 + $0x120] sm:$0xf]
    %v117 = vld [vmem:[#allocation2 + $0x124] sm:$0xf]
    %v118 = vld [vmem:[#allocation2 + $0x128] sm:$0xf]
    %v119 = vld [vmem:[#allocation2 + $0x12c] sm:$0xf]
    %v120 = vld [vmem:[#allocation2 + $0x130] sm:$0xf]
    %v121 = vld [vmem:[#allocation2 + $0x134] sm:$0xf]
    %v122 = vld [vmem:[#allocation2 + $0x138] sm:$0xf]
    %v123 = vld [vmem:[#allocation2 + $0x13c] sm:$0xf]
    %v124 = vld [vmem:[#allocation2 + $0x140] sm:$0xf]
    %v125 = vld [vmem:[#allocation2 + $0x144] sm:$0xf]
    %v126 = vld [vmem:[#allocation2 + $0x148] sm:$0xf]
    %v127 = vld [vmem:[#allocation2 + $0x14c] sm:$0xf]
    %v128 = vld [vmem:[#allocation2 + $0x150] sm:$0xf]
    %v129 = vld [vmem:[#allocation2 + $0x154] sm:$0xf]
    %v130 = vld [vmem:[#allocation2 + $0x158] sm:$0xf]
    %v131 = vld [vmem:[#allocation2 + $0x15c] sm:$0xf]
    %v132 = vld [vmem:[#allocation2 + $0x160] sm:$0xf]
    %v133 = vld [vmem:[#allocation2 + $0x164] sm:$0xf]
    %v134 = vld [vmem:[#allocation2 + $0x168] sm:$0xf]
    %v135 = vld [vmem:[#allocation2 + $0x16c] sm:$0xf]
    %v136 = vld [vmem:[#allocation2 + $0x170] sm:$0xf]
    %v137 = vld [vmem:[#allocation2 + $0x174] sm:$0xf]
    %v138 = vld [vmem:[#allocation2 + $0x178] sm:$0xf]
    %v139 = vld [vmem:[#allocation2 + $0x17c] sm:$0xf]
    %v140 = vld [vmem:[#allocation2 + $0x180] sm:$0xf]
    %v141 = vld [vmem:[#allocation2 + $0x184] sm:$0xf]
    %v142 = vld [vmem:[#allocation2 + $0x188] sm:$0xf]
    %v143 = vld [vmem:[#allocation2 + $0x18c] sm:$0xf]
    %v144 = vld [vmem:[#allocation2 + $0x190] sm:$0xf]
    %v145 = vld [vmem:[#allocation2 + $0x194] sm:$0xf]
    %v146 = vld [vmem:[#allocation2 + $0x198] sm:$0xf]
    %v147 = vld [vmem:[#allocation2 + $0x19c] sm:$0xf]
    %v148 = vld [vmem:[#allocation2 + $0x1a0] sm:$0xf]
    %v149 = vld [vmem:[#allocation2 + $0x1a4] sm:$0xf]
    %v150 = vld [vmem:[#allocation2 + $0x1a8] sm:$0xf]
    %v151 = vld [vmem:[#allocation2 + $0x1ac] sm:$0xf]
    %v152 = vld [vmem:[#allocation2 + $0x1b0] sm:$0xf]
    %v153 = vld [vmem:[#allocation2 + $0x1b4] sm:$0xf]
    %v154 = vld [vmem:[#allocation2 + $0x1b8] sm:$0xf]
    %v155 = vld [vmem:[#allocation2 + $0x1bc] sm:$0xf]
    %v156 = vld [vmem:[#allocation2 + $0x1c0] sm:$0xf]
    %v157 = vld [vmem:[#allocation2 + $0x1c4] sm:$0xf]
    %v158 = vld [vmem:[#allocation2 + $0x1c8] sm:$0xf]
    %v159 = vld [vmem:[#allocation2 + $0x1cc] sm:$0xf]
    %v160 = vld [vmem:[#allocation2 + $0x1d0] sm:$0xf]
    %v161 = vld [vmem:[#allocation2 + $0x1d4] sm:$0xf]
    %v162 = vld [vmem:[#allocation2 + $0x1d8] sm:$0xf]
    %v163 = vld [vmem:[#allocation2 + $0x1dc] sm:$0xf]
    %v164 = vld [vmem:[#allocation2 + $0x1e0] sm:$0xf]
    %v165 = vld [vmem:[#allocation2 + $0x1e4] sm:$0xf]
    %v166 = vld [vmem:[#allocation2 + $0x1e8] sm:$0xf]
    %v167 = vld [vmem:[#allocation2 + $0x1ec] sm:$0xf]
    %v168 = vld [vmem:[#allocation2 + $0x1f0] sm:$0xf]
    %v169 = vld [vmem:[#allocation2 + $0x1f4] sm:$0xf]
    %v170 = vld [vmem:[#allocation2 + $0x1f8] sm:$0xf]
    %v171 = vld [vmem:[#allocation2 + $0x1fc] sm:$0xf]
    %v172 = vld [vmem:[#allocation5] sm:$0xff]
    %v173 = vld [vmem:[#allocation5 + $0x8] sm:$0xff]
    %v174 = vld [vmem:[#allocation5 + $0x10] sm:$0xff]
    %v175 = vld [vmem:[#allocation5 + $0x18] sm:$0xff]
    %v176 = vld [vmem:[#allocation5 + $0x20] sm:$0xff]
    %v177 = vld [vmem:[#allocation5 + $0x28] sm:$0xff]
    %v178 = vld [vmem:[#allocation5 + $0x30] sm:$0xff]
    %v179 = vld [vmem:[#allocation5 + $0x38] sm:$0xff]
    %v180 = vld [vmem:[#allocation5 + $0x40] sm:$0xff]
    %v181 = vld [vmem:[#allocation5 + $0x48] sm:$0xff]
    %v182 = vld [vmem:[#allocation5 + $0x50] sm:$0xff]
    %v183 = vld [vmem:[#allocation5 + $0x58] sm:$0xff]
    %v184 = vld [vmem:[#allocation5 + $0x60] sm:$0xff]
    %v185 = vld [vmem:[#allocation5 + $0x68] sm:$0xff]
    %v186 = vld [vmem:[#allocation5 + $0x70] sm:$0xff]
    %v187 = vld [vmem:[#allocation5 + $0x78] sm:$0xff]
    %v188 = vld [vmem:[%s2] sm:$0x3]
    %v190 = vlaneseq
    %v191 = vshrl.u32 %v190, 7
    %v192 = vsub.s32 0, %v191
    %v193 = vrot.slane %v188, %v192
    %v194 = vlaneseq
    %v195 = vshrl.u32 %v194, 7
    %v196 = vsub.s32 1, %v195
    %v197 = vrot.slane %v188, %v196
    %v328 = vunpack.c.l.b16 %v44
    %v329 = vunpack.c.l.b16 %v45
    %v330 = vunpack.c.l.b16 %v46
    %v331 = vunpack.c.l.b16 %v47
    %v332 = vunpack.c.l.b16 %v48
    %v333 = vunpack.c.l.b16 %v49
    %v334 = vunpack.c.l.b16 %v50
    %v335 = vunpack.c.l.b16 %v51
    %v336 = vunpack.c.l.b16 %v52
    %v337 = vunpack.c.l.b16 %v53
    %v338 = vunpack.c.l.b16 %v54
    %v339 = vunpack.c.l.b16 %v55
    %v340 = vunpack.c.l.b16 %v56
    %v341 = vunpack.c.l.b16 %v57
    %v342 = vunpack.c.l.b16 %v58
    %v343 = vunpack.c.l.b16 %v59
    %v344 = vunpack.c.l.b16 %v60
    %v345 = vunpack.c.l.b16 %v61
    %v346 = vunpack.c.l.b16 %v62
    %v347 = vunpack.c.l.b16 %v63
    %v348 = vunpack.c.l.b16 %v64
    %v349 = vunpack.c.l.b16 %v65
    %v350 = vunpack.c.l.b16 %v66
    %v351 = vunpack.c.l.b16 %v67
    %v352 = vunpack.c.l.b16 %v68
    %v353 = vunpack.c.l.b16 %v69
    %v354 = vunpack.c.l.b16 %v70
    %v355 = vunpack.c.l.b16 %v71
    %v356 = vunpack.c.l.b16 %v72
    %v357 = vunpack.c.l.b16 %v73
    %v358 = vunpack.c.l.b16 %v74
    %v359 = vunpack.c.l.b16 %v75
    %v360 = vunpack.c.l.b16 %v76
    %v361 = vunpack.c.l.b16 %v77
    %v362 = vunpack.c.l.b16 %v78
    %v363 = vunpack.c.l.b16 %v79
    %v364 = vunpack.c.l.b16 %v80
    %v365 = vunpack.c.l.b16 %v81
    %v366 = vunpack.c.l.b16 %v82
    %v367 = vunpack.c.l.b16 %v83
    %v368 = vunpack.c.l.b16 %v84
    %v369 = vunpack.c.l.b16 %v85
    %v370 = vunpack.c.l.b16 %v86
    %v371 = vunpack.c.l.b16 %v87
    %v372 = vunpack.c.l.b16 %v88
    %v373 = vunpack.c.l.b16 %v89
    %v374 = vunpack.c.l.b16 %v90
    %v375 = vunpack.c.l.b16 %v91
    %v376 = vunpack.c.l.b16 %v92
    %v377 = vunpack.c.l.b16 %v93
    %v378 = vunpack.c.l.b16 %v94
    %v379 = vunpack.c.l.b16 %v95
    %v380 = vunpack.c.l.b16 %v96
    %v381 = vunpack.c.l.b16 %v97
    %v382 = vunpack.c.l.b16 %v98
    %v383 = vunpack.c.l.b16 %v99
    %v384 = vunpack.c.l.b16 %v100
    %v385 = vunpack.c.l.b16 %v101
    %v386 = vunpack.c.l.b16 %v102
    %v387 = vunpack.c.l.b16 %v103
    %v388 = vunpack.c.l.b16 %v104
    %v389 = vunpack.c.l.b16 %v105
    %v390 = vunpack.c.l.b16 %v106
    %v391 = vunpack.c.l.b16 %v107
    %v392 = vunpack.c.l.b16 %v108
    %v393 = vunpack.c.l.b16 %v109
    %v394 = vunpack.c.l.b16 %v110
    %v395 = vunpack.c.l.b16 %v111
    %v396 = vunpack.c.l.b16 %v112
    %v397 = vunpack.c.l.b16 %v113
    %v398 = vunpack.c.l.b16 %v114
    %v399 = vunpack.c.l.b16 %v115
    %v400 = vunpack.c.l.b16 %v116
    %v401 = vunpack.c.l.b16 %v117
    %v402 = vunpack.c.l.b16 %v118
    %v403 = vunpack.c.l.b16 %v119
    %v404 = vunpack.c.l.b16 %v120
    %v405 = vunpack.c.l.b16 %v121
    %v406 = vunpack.c.l.b16 %v122
    %v407 = vunpack.c.l.b16 %v123
    %v408 = vunpack.c.l.b16 %v124
    %v409 = vunpack.c.l.b16 %v125
    %v410 = vunpack.c.l.b16 %v126
    %v411 = vunpack.c.l.b16 %v127
    %v412 = vunpack.c.l.b16 %v128
    %v413 = vunpack.c.l.b16 %v129
    %v414 = vunpack.c.l.b16 %v130
    %v415 = vunpack.c.l.b16 %v131
    %v416 = vunpack.c.l.b16 %v132
    %v417 = vunpack.c.l.b16 %v133
    %v418 = vunpack.c.l.b16 %v134
    %v419 = vunpack.c.l.b16 %v135
    %v420 = vunpack.c.l.b16 %v136
    %v421 = vunpack.c.l.b16 %v137
    %v422 = vunpack.c.l.b16 %v138
    %v423 = vunpack.c.l.b16 %v139
    %v424 = vunpack.c.l.b16 %v140
    %v425 = vunpack.c.l.b16 %v141
    %v426 = vunpack.c.l.b16 %v142
    %v427 = vunpack.c.l.b16 %v143
    %v428 = vunpack.c.l.b16 %v144
    %v429 = vunpack.c.l.b16 %v145
    %v430 = vunpack.c.l.b16 %v146
    %v431 = vunpack.c.l.b16 %v147
    %v432 = vunpack.c.l.b16 %v148
    %v433 = vunpack.c.l.b16 %v149
    %v434 = vunpack.c.l.b16 %v150
    %v435 = vunpack.c.l.b16 %v151
    %v436 = vunpack.c.l.b16 %v152
    %v437 = vunpack.c.l.b16 %v153
    %v438 = vunpack.c.l.b16 %v154
    %v439 = vunpack.c.l.b16 %v155
    %v440 = vunpack.c.l.b16 %v156
    %v441 = vunpack.c.l.b16 %v157
    %v442 = vunpack.c.l.b16 %v158
    %v443 = vunpack.c.l.b16 %v159
    %v444 = vunpack.c.l.b16 %v160
    %v445 = vunpack.c.l.b16 %v161
    %v446 = vunpack.c.l.b16 %v162
    %v447 = vunpack.c.l.b16 %v163
    %v448 = vunpack.c.l.b16 %v164
    %v449 = vunpack.c.l.b16 %v165
    %v450 = vunpack.c.l.b16 %v166
    %v451 = vunpack.c.l.b16 %v167
    %v452 = vunpack.c.l.b16 %v168
    %v453 = vunpack.c.l.b16 %v169
    %v454 = vunpack.c.l.b16 %v170
    %v455 = vunpack.c.l.b16 %v171
    %v456 = vpack.c.b16 %v329, %v328
    %v457 = vpack.c.b16 %v331, %v330
    %v458 = vpack.c.b16 %v333, %v332
    %v459 = vpack.c.b16 %v335, %v334
    %v460 = vpack.c.b16 %v337, %v336
    %v461 = vpack.c.b16 %v339, %v338
    %v462 = vpack.c.b16 %v341, %v340
    %v463 = vpack.c.b16 %v343, %v342
    %v464 = vpack.c.b16 %v345, %v344
    %v465 = vpack.c.b16 %v347, %v346
    %v466 = vpack.c.b16 %v349, %v348
    %v467 = vpack.c.b16 %v351, %v350
    %v468 = vpack.c.b16 %v353, %v352
    %v469 = vpack.c.b16 %v355, %v354
    %v470 = vpack.c.b16 %v357, %v356
    %v471 = vpack.c.b16 %v359, %v358
    %v472 = vpack.c.b16 %v361, %v360
    %v473 = vpack.c.b16 %v363, %v362
    %v474 = vpack.c.b16 %v365, %v364
    %v475 = vpack.c.b16 %v367, %v366
    %v476 = vpack.c.b16 %v369, %v368
    %v477 = vpack.c.b16 %v371, %v370
    %v478 = vpack.c.b16 %v373, %v372
    %v479 = vpack.c.b16 %v375, %v374
    %v480 = vpack.c.b16 %v377, %v376
    %v481 = vpack.c.b16 %v379, %v378
    %v482 = vpack.c.b16 %v381, %v380
    %v483 = vpack.c.b16 %v383, %v382
    %v484 = vpack.c.b16 %v385, %v384
    %v485 = vpack.c.b16 %v387, %v386
    %v486 = vpack.c.b16 %v389, %v388
    %v487 = vpack.c.b16 %v391, %v390
    %v488 = vpack.c.b16 %v393, %v392
    %v489 = vpack.c.b16 %v395, %v394
    %v490 = vpack.c.b16 %v397, %v396
    %v491 = vpack.c.b16 %v399, %v398
    %v492 = vpack.c.b16 %v401, %v400
    %v493 = vpack.c.b16 %v403, %v402
    %v494 = vpack.c.b16 %v405, %v404
    %v495 = vpack.c.b16 %v407, %v406
    %v496 = vpack.c.b16 %v409, %v408
    %v497 = vpack.c.b16 %v411, %v410
    %v498 = vpack.c.b16 %v413, %v412
    %v499 = vpack.c.b16 %v415, %v414
    %v500 = vpack.c.b16 %v417, %v416
    %v501 = vpack.c.b16 %v419, %v418
    %v502 = vpack.c.b16 %v421, %v420
    %v503 = vpack.c.b16 %v423, %v422
    %v504 = vpack.c.b16 %v425, %v424
    %v505 = vpack.c.b16 %v427, %v426
    %v506 = vpack.c.b16 %v429, %v428
    %v507 = vpack.c.b16 %v431, %v430
    %v508 = vpack.c.b16 %v433, %v432
    %v509 = vpack.c.b16 %v435, %v434
    %v510 = vpack.c.b16 %v437, %v436
    %v511 = vpack.c.b16 %v439, %v438
    %v512 = vpack.c.b16 %v441, %v440
    %v513 = vpack.c.b16 %v443, %v442
    %v514 = vpack.c.b16 %v445, %v444
    %v515 = vpack.c.b16 %v447, %v446
    %v516 = vpack.c.b16 %v449, %v448
    %v517 = vpack.c.b16 %v451, %v450
    %v518 = vpack.c.b16 %v453, %v452
    %v519 = vpack.c.b16 %v455, %v454
    %v600 = vunpack.c.l.b16 %v172
    %v601 = vunpack.c.h.b16 %v172
    %v602 = vunpack.c.l.b16 %v173
    %v603 = vunpack.c.h.b16 %v173
    %v604 = vunpack.c.l.b16 %v174
    %v605 = vunpack.c.h.b16 %v174
    %v606 = vunpack.c.l.b16 %v175
    %v607 = vunpack.c.h.b16 %v175
    %v608 = vunpack.c.l.b16 %v176
    %v609 = vunpack.c.h.b16 %v176
    %v610 = vunpack.c.l.b16 %v177
    %v611 = vunpack.c.h.b16 %v177
    %v612 = vunpack.c.l.b16 %v178
    %v613 = vunpack.c.h.b16 %v178
    %v614 = vunpack.c.l.b16 %v179
    %v615 = vunpack.c.h.b16 %v179
    %v616 = vunpack.c.l.b16 %v180
    %v617 = vunpack.c.h.b16 %v180
    %v618 = vunpack.c.l.b16 %v181
    %v619 = vunpack.c.h.b16 %v181
    %v620 = vunpack.c.l.b16 %v182
    %v621 = vunpack.c.h.b16 %v182
    %v622 = vunpack.c.l.b16 %v183
    %v623 = vunpack.c.h.b16 %v183
    %v624 = vunpack.c.l.b16 %v184
    %v625 = vunpack.c.h.b16 %v184
    %v626 = vunpack.c.l.b16 %v185
    %v627 = vunpack.c.h.b16 %v185
    %v628 = vunpack.c.l.b16 %v186
    %v629 = vunpack.c.h.b16 %v186
    %v630 = vunpack.c.l.b16 %v187
    %v631 = vunpack.c.h.b16 %v187
    %v632 = vpack.c.b16 %v602, %v600
    %v633 = vpack.c.b16 %v603, %v601
    %v634 = vpack.c.b16 %v606, %v604
    %v635 = vpack.c.b16 %v607, %v605
    %v636 = vpack.c.b16 %v610, %v608
    %v637 = vpack.c.b16 %v611, %v609
    %v638 = vpack.c.b16 %v614, %v612
    %v639 = vpack.c.b16 %v615, %v613
    %v640 = vpack.c.b16 %v618, %v616
    %v641 = vpack.c.b16 %v619, %v617
    %v642 = vpack.c.b16 %v622, %v620
    %v643 = vpack.c.b16 %v623, %v621
    %v644 = vpack.c.b16 %v626, %v624
    %v645 = vpack.c.b16 %v627, %v625
    %v646 = vpack.c.b16 %v630, %v628
    %v647 = vpack.c.b16 %v631, %v629
    %664 = vmatprep.subr.bf16.mxu0 %v633
    %665 = vmatpush1.bf16.msra.mxu0 %v632
    %666 = vmatprep.subr.bf16.mxu0 %v635
    %667 = vmatpush1.bf16.msra.mxu0 %v634
    %668 = vmatprep.subr.bf16.mxu0 %v637
    %669 = vmatpush1.bf16.msra.mxu0 %v636
    %670 = vmatprep.subr.bf16.mxu0 %v639
    %671 = vmatpush1.bf16.msra.mxu0 %v638
    %672 = vmatprep.subr.bf16.mxu0 %v641
    %673 = vmatpush1.bf16.msra.mxu0 %v640
    %674 = vmatprep.subr.bf16.mxu0 %v643
    %675 = vmatpush1.bf16.msra.mxu0 %v642
    %676 = vmatprep.subr.bf16.mxu0 %v645
    %677 = vmatpush1.bf16.msra.mxu0 %v644
    %678 = vmatprep.subr.bf16.mxu0 %v647
    %679 = vmatpush1.bf16.msra.mxu0 %v646
    %680 = vmatprep.subr.bf16.mxu0 0
    %681 = vmatpush1.bf16.msra.mxu0 0
    %682 = vmatprep.subr.bf16.mxu0 0
    %683 = vmatpush1.bf16.msra.mxu0 0
    %684 = vmatprep.subr.bf16.mxu0 0
    %685 = vmatpush1.bf16.msra.mxu0 0
    %686 = vmatprep.subr.bf16.mxu0 0
    %687 = vmatpush1.bf16.msra.mxu0 0
    %688 = vmatprep.subr.bf16.mxu0 0
    %689 = vmatpush1.bf16.msra.mxu0 0
    %690 = vmatprep.subr.bf16.mxu0 0
    %691 = vmatpush1.bf16.msra.mxu0 0
    %692 = vmatprep.subr.bf16.mxu0 0
    %693 = vmatpush1.bf16.msra.mxu0 0
    %694 = vmatprep.subr.bf16.mxu0 0
    %695 = vmatpush1.bf16.msra.mxu0 0
    %696 = vmatprep.mubr.bf16.mxu0 0
    %697 = vmatmul.mubr.bf16.gmra.mrb[0].mxu0 %v456
    %v698 = vpop.f32.mrb[0].mxu0
    %v699 = vadd.f32 %v193, %v698
    %v700 = vpop.f32.mrb[0].mxu0
    %v701 = vadd.f32 %v197, %v700
    %v702 = vpop.f32.mrb[0].mxu0
    %v703 = vadd.f32 %v193, %v702
    %v704 = vpop.f32.mrb[0].mxu0
    %v705 = vadd.f32 %v197, %v704
    %706 = vmatprep.mubr.bf16.mxu0 0
    %707 = vmatmul.mubr.bf16.gmra.mrb[0].mxu0 %v457
    %v708 = vpop.f32.mrb[0].mxu0
    %v709 = vadd.f32 %v193, %v708
    %v710 = vpop.f32.mrb[0].mxu0
    %v711 = vadd.f32 %v197, %v710
    %v712 = vpop.f32.mrb[0].mxu0
    %v713 = vadd.f32 %v193, %v712
    %v714 = vpop.f32.mrb[0].mxu0
    %v715 = vadd.f32 %v197, %v714
    %716 = vmatprep.mubr.bf16.mxu0 0
    %717 = vmatmul.mubr.bf16.gmra.mrb[0].mxu0 %v458
    %v718 = vpop.f32.mrb[0].mxu0
    %v719 = vadd.f32 %v193, %v718
    %v720 = vpop.f32.mrb[0].mxu0
    %v721 = vadd.f32 %v197, %v720
    %v722 = vpop.f32.mrb[0].mxu0
    %v723 = vadd.f32 %v193, %v722
    %v724 = vpop.f32.mrb[0].mxu0
    %v725 = vadd.f32 %v197, %v724
    %726 = vmatprep.mubr.bf16.mxu0 0
    %727 = vmatmul.mubr.bf16.gmra.mrb[0].mxu0 %v459
    %v728 = vpop.f32.mrb[0].mxu0
    %v729 = vadd.f32 %v193, %v728
    %v730 = vpop.f32.mrb[0].mxu0
    %v731 = vadd.f32 %v197, %v730
    %v732 = vpop.f32.mrb[0].mxu0
    %v733 = vadd.f32 %v193, %v732
    %v734 = vpop.f32.mrb[0].mxu0
    %v735 = vadd.f32 %v197, %v734
    %736 = vmatprep.mubr.bf16.mxu0 0
    %737 = vmatmul.mubr.bf16.gmra.mrb[0].mxu0 %v460
    %v738 = vpop.f32.mrb[0].mxu0
    %v739 = vadd.f32 %v193, %v738
    %v740 = vpop.f32.mrb[0].mxu0
    %v741 = vadd.f32 %v197, %v740
    %v742 = vpop.f32.mrb[0].mxu0
    %v743 = vadd.f32 %v193, %v742
    %v744 = vpop.f32.mrb[0].mxu0
    %v745 = vadd.f32 %v197, %v744
    %746 = vmatprep.mubr.bf16.mxu0 0
    %747 = vmatmul.mubr.bf16.gmra.mrb[0].mxu0 %v461
    %v748 = vpop.f32.mrb[0].mxu0
    %v749 = vadd.f32 %v193, %v748
    %v750 = vpop.f32.mrb[0].mxu0
    %v751 = vadd.f32 %v197, %v750
    %v752 = vpop.f32.mrb[0].mxu0
    %v753 = vadd.f32 %v193, %v752
    %v754 = vpop.f32.mrb[0].mxu0
    %v755 = vadd.f32 %v197, %v754
    %756 = vmatprep.mubr.bf16.mxu0 0
    %757 = vmatmul.mubr.bf16.gmra.mrb[0].mxu0 %v462
    %v758 = vpop.f32.mrb[0].mxu0
    %v759 = vadd.f32 %v193, %v758
    %v760 = vpop.f32.mrb[0].mxu0
    %v761 = vadd.f32 %v197, %v760
    %v762 = vpop.f32.mrb[0].mxu0
    %v763 = vadd.f32 %v193, %v762
    %v764 = vpop.f32.mrb[0].mxu0
    %v765 = vadd.f32 %v197, %v764
    %766 = vmatprep.mubr.bf16.mxu0 0
    %767 = vmatmul.mubr.bf16.gmra.mrb[0].mxu0 %v463
    %v768 = vpop.f32.mrb[0].mxu0
    %v769 = vadd.f32 %v193, %v768
    %v770 = vpop.f32.mrb[0].mxu0
    %v771 = vadd.f32 %v197, %v770
    %v772 = vpop.f32.mrb[0].mxu0
    %v773 = vadd.f32 %v193, %v772
    %v774 = vpop.f32.mrb[0].mxu0
    %v775 = vadd.f32 %v197, %v774
    %776 = vmatprep.mubr.bf16.mxu0 0
    %777 = vmatmul.mubr.bf16.gmra.mrb[0].mxu0 %v464
    %v778 = vpop.f32.mrb[0].mxu0
    %v779 = vadd.f32 %v193, %v778
    %v780 = vpop.f32.mrb[0].mxu0
    %v781 = vadd.f32 %v197, %v780
    %v782 = vpop.f32.mrb[0].mxu0
    %v783 = vadd.f32 %v193, %v782
    %v784 = vpop.f32.mrb[0].mxu0
    %v785 = vadd.f32 %v197, %v784
    %786 = vmatprep.mubr.bf16.mxu0 0
    %787 = vmatmul.mubr.bf16.gmra.mrb[0].mxu0 %v465
    %v788 = vpop.f32.mrb[0].mxu0
    %v789 = vadd.f32 %v193, %v788
    %v790 = vpop.f32.mrb[0].mxu0
    %v791 = vadd.f32 %v197, %v790
    %v792 = vpop.f32.mrb[0].mxu0
    %v793 = vadd.f32 %v193, %v792
    %v794 = vpop.f32.mrb[0].mxu0
    %v795 = vadd.f32 %v197, %v794
    %796 = vmatprep.mubr.bf16.mxu0 0
    %797 = vmatmul.mubr.bf16.gmra.mrb[0].mxu0 %v466
    %v798 = vpop.f32.mrb[0].mxu0
    %v799 = vadd.f32 %v193, %v798
    %v800 = vpop.f32.mrb[0].mxu0
    %v801 = vadd.f32 %v197, %v800
    %v802 = vpop.f32.mrb[0].mxu0
    %v803 = vadd.f32 %v193, %v802
    %v804 = vpop.f32.mrb[0].mxu0
    %v805 = vadd.f32 %v197, %v804
    %806 = vmatprep.mubr.bf16.mxu0 0
    %807 = vmatmul.mubr.bf16.gmra.mrb[0].mxu0 %v467
    %v808 = vpop.f32.mrb[0].mxu0
    %v809 = vadd.f32 %v193, %v808
    %v810 = vpop.f32.mrb[0].mxu0
    %v811 = vadd.f32 %v197, %v810
    %v812 = vpop.f32.mrb[0].mxu0
    %v813 = vadd.f32 %v193, %v812
    %v814 = vpop.f32.mrb[0].mxu0
    %v815 = vadd.f32 %v197, %v814
    %816 = vmatprep.mubr.bf16.mxu0 0
    %817 = vmatmul.mubr.bf16.gmra.mrb[0].mxu0 %v468
    %v818 = vpop.f32.mrb[0].mxu0
    %v819 = vadd.f32 %v193, %v818
    %v820 = vpop.f32.mrb[0].mxu0
    %v821 = vadd.f32 %v197, %v820
    %v822 = vpop.f32.mrb[0].mxu0
    %v823 = vadd.f32 %v193, %v822
    %v824 = vpop.f32.mrb[0].mxu0
    %v825 = vadd.f32 %v197, %v824
    %826 = vmatprep.mubr.bf16.mxu0 0
    %827 = vmatmul.mubr.bf16.gmra.mrb[0].mxu0 %v469
    %v828 = vpop.f32.mrb[0].mxu0
    %v829 = vadd.f32 %v193, %v828
    %v830 = vpop.f32.mrb[0].mxu0
    %v831 = vadd.f32 %v197, %v830
    %v832 = vpop.f32.mrb[0].mxu0
    %v833 = vadd.f32 %v193, %v832
    %v834 = vpop.f32.mrb[0].mxu0
    %v835 = vadd.f32 %v197, %v834
    %836 = vmatprep.mubr.bf16.mxu0 0
    %837 = vmatmul.mubr.bf16.gmra.mrb[0].mxu0 %v470
    %v838 = vpop.f32.mrb[0].mxu0
    %v839 = vadd.f32 %v193, %v838
    %v840 = vpop.f32.mrb[0].mxu0
    %v841 = vadd.f32 %v197, %v840
    %v842 = vpop.f32.mrb[0].mxu0
    %v843 = vadd.f32 %v193, %v842
    %v844 = vpop.f32.mrb[0].mxu0
    %v845 = vadd.f32 %v197, %v844
    %846 = vmatprep.mubr.bf16.mxu0 0
    %847 = vmatmul.mubr.bf16.gmra.mrb[0].mxu0 %v471
    %v848 = vpop.f32.mrb[0].mxu0
    %v849 = vadd.f32 %v193, %v848
    %v850 = vpop.f32.mrb[0].mxu0
    %v851 = vadd.f32 %v197, %v850
    %v852 = vpop.f32.mrb[0].mxu0
    %v853 = vadd.f32 %v193, %v852
    %v854 = vpop.f32.mrb[0].mxu0
    %v855 = vadd.f32 %v197, %v854
    %856 = vmatprep.mubr.bf16.mxu0 0
    %857 = vmatmul.mubr.bf16.gmra.mrb[0].mxu0 %v472
    %v858 = vpop.f32.mrb[0].mxu0
    %v859 = vadd.f32 %v193, %v858
    %v860 = vpop.f32.mrb[0].mxu0
    %v861 = vadd.f32 %v197, %v860
    %v862 = vpop.f32.mrb[0].mxu0
    %v863 = vadd.f32 %v193, %v862
    %v864 = vpop.f32.mrb[0].mxu0
    %v865 = vadd.f32 %v197, %v864
    %866 = vmatprep.mubr.bf16.mxu0 0
    %867 = vmatmul.mubr.bf16.gmra.mrb[0].mxu0 %v473
    %v868 = vpop.f32.mrb[0].mxu0
    %v869 = vadd.f32 %v193, %v868
    %v870 = vpop.f32.mrb[0].mxu0
    %v871 = vadd.f32 %v197, %v870
    %v872 = vpop.f32.mrb[0].mxu0
    %v873 = vadd.f32 %v193, %v872
    %v874 = vpop.f32.mrb[0].mxu0
    %v875 = vadd.f32 %v197, %v874
    %876 = vmatprep.mubr.bf16.mxu0 0
    %877 = vmatmul.mubr.bf16.gmra.mrb[0].mxu0 %v474
    %v878 = vpop.f32.mrb[0].mxu0
    %v879 = vadd.f32 %v193, %v878
    %v880 = vpop.f32.mrb[0].mxu0
    %v881 = vadd.f32 %v197, %v880
    %v882 = vpop.f32.mrb[0].mxu0
    %v883 = vadd.f32 %v193, %v882
    %v884 = vpop.f32.mrb[0].mxu0
    %v885 = vadd.f32 %v197, %v884
    %886 = vmatprep.mubr.bf16.mxu0 0
    %887 = vmatmul.mubr.bf16.gmra.mrb[0].mxu0 %v475
    %v888 = vpop.f32.mrb[0].mxu0
    %v889 = vadd.f32 %v193, %v888
    %v890 = vpop.f32.mrb[0].mxu0
    %v891 = vadd.f32 %v197, %v890
    %v892 = vpop.f32.mrb[0].mxu0
    %v893 = vadd.f32 %v193, %v892
    %v894 = vpop.f32.mrb[0].mxu0
    %v895 = vadd.f32 %v197, %v894
    %896 = vmatprep.mubr.bf16.mxu0 0
    %897 = vmatmul.mubr.bf16.gmra.mrb[0].mxu0 %v476
    %v898 = vpop.f32.mrb[0].mxu0
    %v899 = vadd.f32 %v193, %v898
    %v900 = vpop.f32.mrb[0].mxu0
    %v901 = vadd.f32 %v197, %v900
    %v902 = vpop.f32.mrb[0].mxu0
    %v903 = vadd.f32 %v193, %v902
    %v904 = vpop.f32.mrb[0].mxu0
    %v905 = vadd.f32 %v197, %v904
    %906 = vmatprep.mubr.bf16.mxu0 0
    %907 = vmatmul.mubr.bf16.gmra.mrb[0].mxu0 %v477
    %v908 = vpop.f32.mrb[0].mxu0
    %v909 = vadd.f32 %v193, %v908
    %v910 = vpop.f32.mrb[0].mxu0
    %v911 = vadd.f32 %v197, %v910
    %v912 = vpop.f32.mrb[0].mxu0
    %v913 = vadd.f32 %v193, %v912
    %v914 = vpop.f32.mrb[0].mxu0
    %v915 = vadd.f32 %v197, %v914
    %916 = vmatprep.mubr.bf16.mxu0 0
    %917 = vmatmul.mubr.bf16.gmra.mrb[0].mxu0 %v478
    %v918 = vpop.f32.mrb[0].mxu0
    %v919 = vadd.f32 %v193, %v918
    %v920 = vpop.f32.mrb[0].mxu0
    %v921 = vadd.f32 %v197, %v920
    %v922 = vpop.f32.mrb[0].mxu0
    %v923 = vadd.f32 %v193, %v922
    %v924 = vpop.f32.mrb[0].mxu0
    %v925 = vadd.f32 %v197, %v924
    %926 = vmatprep.mubr.bf16.mxu0 0
    %927 = vmatmul.mubr.bf16.gmra.mrb[0].mxu0 %v479
    %v928 = vpop.f32.mrb[0].mxu0
    %v929 = vadd.f32 %v193, %v928
    %v930 = vpop.f32.mrb[0].mxu0
    %v931 = vadd.f32 %v197, %v930
    %v932 = vpop.f32.mrb[0].mxu0
    %v933 = vadd.f32 %v193, %v932
    %v934 = vpop.f32.mrb[0].mxu0
    %v935 = vadd.f32 %v197, %v934
    %936 = vmatprep.mubr.bf16.mxu0 0
    %937 = vmatmul.mubr.bf16.gmra.mrb[0].mxu0 %v480
    %v938 = vpop.f32.mrb[0].mxu0
    %v939 = vadd.f32 %v193, %v938
    %v940 = vpop.f32.mrb[0].mxu0
    %v941 = vadd.f32 %v197, %v940
    %v942 = vpop.f32.mrb[0].mxu0
    %v943 = vadd.f32 %v193, %v942
    %v944 = vpop.f32.mrb[0].mxu0
    %v945 = vadd.f32 %v197, %v944
    %946 = vmatprep.mubr.bf16.mxu0 0
    %947 = vmatmul.mubr.bf16.gmra.mrb[0].mxu0 %v481
    %v948 = vpop.f32.mrb[0].mxu0
    %v949 = vadd.f32 %v193, %v948
    %v950 = vpop.f32.mrb[0].mxu0
    %v951 = vadd.f32 %v197, %v950
    %v952 = vpop.f32.mrb[0].mxu0
    %v953 = vadd.f32 %v193, %v952
    %v954 = vpop.f32.mrb[0].mxu0
    %v955 = vadd.f32 %v197, %v954
    %956 = vmatprep.mubr.bf16.mxu0 0
    %957 = vmatmul.mubr.bf16.gmra.mrb[0].mxu0 %v482
    %v958 = vpop.f32.mrb[0].mxu0
    %v959 = vadd.f32 %v193, %v958
    %v960 = vpop.f32.mrb[0].mxu0
    %v961 = vadd.f32 %v197, %v960
    %v962 = vpop.f32.mrb[0].mxu0
    %v963 = vadd.f32 %v193, %v962
    %v964 = vpop.f32.mrb[0].mxu0
    %v965 = vadd.f32 %v197, %v964
    %966 = vmatprep.mubr.bf16.mxu0 0
    %967 = vmatmul.mubr.bf16.gmra.mrb[0].mxu0 %v483
    %v968 = vpop.f32.mrb[0].mxu0
    %v969 = vadd.f32 %v193, %v968
    %v970 = vpop.f32.mrb[0].mxu0
    %v971 = vadd.f32 %v197, %v970
    %v972 = vpop.f32.mrb[0].mxu0
    %v973 = vadd.f32 %v193, %v972
    %v974 = vpop.f32.mrb[0].mxu0
    %v975 = vadd.f32 %v197, %v974
    %976 = vmatprep.mubr.bf16.mxu0 0
    %977 = vmatmul.mubr.bf16.gmra.mrb[0].mxu0 %v484
    %v978 = vpop.f32.mrb[0].mxu0
    %v979 = vadd.f32 %v193, %v978
    %v980 = vpop.f32.mrb[0].mxu0
    %v981 = vadd.f32 %v197, %v980
    %v982 = vpop.f32.mrb[0].mxu0
    %v983 = vadd.f32 %v193, %v982
    %v984 = vpop.f32.mrb[0].mxu0
    %v985 = vadd.f32 %v197, %v984
    %986 = vmatprep.mubr.bf16.mxu0 0
    %987 = vmatmul.mubr.bf16.gmra.mrb[0].mxu0 %v485
    %v988 = vpop.f32.mrb[0].mxu0
    %v989 = vadd.f32 %v193, %v988
    %v990 = vpop.f32.mrb[0].mxu0
    %v991 = vadd.f32 %v197, %v990
    %v992 = vpop.f32.mrb[0].mxu0
    %v993 = vadd.f32 %v193, %v992
    %v994 = vpop.f32.mrb[0].mxu0
    %v995 = vadd.f32 %v197, %v994
    %996 = vmatprep.mubr.bf16.mxu0 0
    %997 = vmatmul.mubr.bf16.gmra.mrb[0].mxu0 %v486
    %v998 = vpop.f32.mrb[0].mxu0
    %v999 = vadd.f32 %v193, %v998
    %v1000 = vpop.f32.mrb[0].mxu0
    %v1001 = vadd.f32 %v197, %v1000
    %v1002 = vpop.f32.mrb[0].mxu0
    %v1003 = vadd.f32 %v193, %v1002
    %v1004 = vpop.f32.mrb[0].mxu0
    %v1005 = vadd.f32 %v197, %v1004
    %1006 = vmatprep.mubr.bf16.mxu0 0
    %1007 = vmatmul.mubr.bf16.gmra.mrb[0].mxu0 %v487
    %v1008 = vpop.f32.mrb[0].mxu0
    %v1009 = vadd.f32 %v193, %v1008
    %v1010 = vpop.f32.mrb[0].mxu0
    %v1011 = vadd.f32 %v197, %v1010
    %v1012 = vpop.f32.mrb[0].mxu0
    %v1013 = vadd.f32 %v193, %v1012
    %v1014 = vpop.f32.mrb[0].mxu0
    %v1015 = vadd.f32 %v197, %v1014
    %1016 = vmatprep.mubr.bf16.mxu0 0
    %1017 = vmatmul.mubr.bf16.gmra.mrb[0].mxu0 %v488
    %v1018 = vpop.f32.mrb[0].mxu0
    %v1019 = vadd.f32 %v193, %v1018
    %v1020 = vpop.f32.mrb[0].mxu0
    %v1021 = vadd.f32 %v197, %v1020
    %v1022 = vpop.f32.mrb[0].mxu0
    %v1023 = vadd.f32 %v193, %v1022
    %v1024 = vpop.f32.mrb[0].mxu0
    %v1025 = vadd.f32 %v197, %v1024
    %1026 = vmatprep.mubr.bf16.mxu0 0
    %1027 = vmatmul.mubr.bf16.gmra.mrb[0].mxu0 %v489
    %v1028 = vpop.f32.mrb[0].mxu0
    %v1029 = vadd.f32 %v193, %v1028
    %v1030 = vpop.f32.mrb[0].mxu0
    %v1031 = vadd.f32 %v197, %v1030
    %v1032 = vpop.f32.mrb[0].mxu0
    %v1033 = vadd.f32 %v193, %v1032
    %v1034 = vpop.f32.mrb[0].mxu0
    %v1035 = vadd.f32 %v197, %v1034
    %1036 = vmatprep.mubr.bf16.mxu0 0
    %1037 = vmatmul.mubr.bf16.gmra.mrb[0].mxu0 %v490
    %v1038 = vpop.f32.mrb[0].mxu0
    %v1039 = vadd.f32 %v193, %v1038
    %v1040 = vpop.f32.mrb[0].mxu0
    %v1041 = vadd.f32 %v197, %v1040
    %v1042 = vpop.f32.mrb[0].mxu0
    %v1043 = vadd.f32 %v193, %v1042
    %v1044 = vpop.f32.mrb[0].mxu0
    %v1045 = vadd.f32 %v197, %v1044
    %1046 = vmatprep.mubr.bf16.mxu0 0
    %1047 = vmatmul.mubr.bf16.gmra.mrb[0].mxu0 %v491
    %v1048 = vpop.f32.mrb[0].mxu0
    %v1049 = vadd.f32 %v193, %v1048
    %v1050 = vpop.f32.mrb[0].mxu0
    %v1051 = vadd.f32 %v197, %v1050
    %v1052 = vpop.f32.mrb[0].mxu0
    %v1053 = vadd.f32 %v193, %v1052
    %v1054 = vpop.f32.mrb[0].mxu0
    %v1055 = vadd.f32 %v197, %v1054
    %1056 = vmatprep.mubr.bf16.mxu0 0
    %1057 = vmatmul.mubr.bf16.gmra.mrb[0].mxu0 %v492
    %v1058 = vpop.f32.mrb[0].mxu0
    %v1059 = vadd.f32 %v193, %v1058
    %v1060 = vpop.f32.mrb[0].mxu0
    %v1061 = vadd.f32 %v197, %v1060
    %v1062 = vpop.f32.mrb[0].mxu0
    %v1063 = vadd.f32 %v193, %v1062
    %v1064 = vpop.f32.mrb[0].mxu0
    %v1065 = vadd.f32 %v197, %v1064
    %1066 = vmatprep.mubr.bf16.mxu0 0
    %1067 = vmatmul.mubr.bf16.gmra.mrb[0].mxu0 %v493
    %v1068 = vpop.f32.mrb[0].mxu0
    %v1069 = vadd.f32 %v193, %v1068
    %v1070 = vpop.f32.mrb[0].mxu0
    %v1071 = vadd.f32 %v197, %v1070
    %v1072 = vpop.f32.mrb[0].mxu0
    %v1073 = vadd.f32 %v193, %v1072
    %v1074 = vpop.f32.mrb[0].mxu0
    %v1075 = vadd.f32 %v197, %v1074
    %1076 = vmatprep.mubr.bf16.mxu0 0
    %1077 = vmatmul.mubr.bf16.gmra.mrb[0].mxu0 %v494
    %v1078 = vpop.f32.mrb[0].mxu0
    %v1079 = vadd.f32 %v193, %v1078
    %v1080 = vpop.f32.mrb[0].mxu0
    %v1081 = vadd.f32 %v197, %v1080
    %v1082 = vpop.f32.mrb[0].mxu0
    %v1083 = vadd.f32 %v193, %v1082
    %v1084 = vpop.f32.mrb[0].mxu0
    %v1085 = vadd.f32 %v197, %v1084
    %1086 = vmatprep.mubr.bf16.mxu0 0
    %1087 = vmatmul.mubr.bf16.gmra.mrb[0].mxu0 %v495
    %v1088 = vpop.f32.mrb[0].mxu0
    %v1089 = vadd.f32 %v193, %v1088
    %v1090 = vpop.f32.mrb[0].mxu0
    %v1091 = vadd.f32 %v197, %v1090
    %v1092 = vpop.f32.mrb[0].mxu0
    %v1093 = vadd.f32 %v193, %v1092
    %v1094 = vpop.f32.mrb[0].mxu0
    %v1095 = vadd.f32 %v197, %v1094
    %1096 = vmatprep.mubr.bf16.mxu0 0
    %1097 = vmatmul.mubr.bf16.gmra.mrb[0].mxu0 %v496
    %v1098 = vpop.f32.mrb[0].mxu0
    %v1099 = vadd.f32 %v193, %v1098
    %v1100 = vpop.f32.mrb[0].mxu0
    %v1101 = vadd.f32 %v197, %v1100
    %v1102 = vpop.f32.mrb[0].mxu0
    %v1103 = vadd.f32 %v193, %v1102
    %v1104 = vpop.f32.mrb[0].mxu0
    %v1105 = vadd.f32 %v197, %v1104
    %1106 = vmatprep.mubr.bf16.mxu0 0
    %1107 = vmatmul.mubr.bf16.gmra.mrb[0].mxu0 %v497
    %v1108 = vpop.f32.mrb[0].mxu0
    %v1109 = vadd.f32 %v193, %v1108
    %v1110 = vpop.f32.mrb[0].mxu0
    %v1111 = vadd.f32 %v197, %v1110
    %v1112 = vpop.f32.mrb[0].mxu0
    %v1113 = vadd.f32 %v193, %v1112
    %v1114 = vpop.f32.mrb[0].mxu0
    %v1115 = vadd.f32 %v197, %v1114
    %1116 = vmatprep.mubr.bf16.mxu0 0
    %1117 = vmatmul.mubr.bf16.gmra.mrb[0].mxu0 %v498
    %v1118 = vpop.f32.mrb[0].mxu0
    %v1119 = vadd.f32 %v193, %v1118
    %v1120 = vpop.f32.mrb[0].mxu0
    %v1121 = vadd.f32 %v197, %v1120
    %v1122 = vpop.f32.mrb[0].mxu0
    %v1123 = vadd.f32 %v193, %v1122
    %v1124 = vpop.f32.mrb[0].mxu0
    %v1125 = vadd.f32 %v197, %v1124
    %1126 = vmatprep.mubr.bf16.mxu0 0
    %1127 = vmatmul.mubr.bf16.gmra.mrb[0].mxu0 %v499
    %v1128 = vpop.f32.mrb[0].mxu0
    %v1129 = vadd.f32 %v193, %v1128
    %v1130 = vpop.f32.mrb[0].mxu0
    %v1131 = vadd.f32 %v197, %v1130
    %v1132 = vpop.f32.mrb[0].mxu0
    %v1133 = vadd.f32 %v193, %v1132
    %v1134 = vpop.f32.mrb[0].mxu0
    %v1135 = vadd.f32 %v197, %v1134
    %1136 = vmatprep.mubr.bf16.mxu0 0
    %1137 = vmatmul.mubr.bf16.gmra.mrb[0].mxu0 %v500
    %v1138 = vpop.f32.mrb[0].mxu0
    %v1139 = vadd.f32 %v193, %v1138
    %v1140 = vpop.f32.mrb[0].mxu0
    %v1141 = vadd.f32 %v197, %v1140
    %v1142 = vpop.f32.mrb[0].mxu0
    %v1143 = vadd.f32 %v193, %v1142
    %v1144 = vpop.f32.mrb[0].mxu0
    %v1145 = vadd.f32 %v197, %v1144
    %1146 = vmatprep.mubr.bf16.mxu0 0
    %1147 = vmatmul.mubr.bf16.gmra.mrb[0].mxu0 %v501
    %v1148 = vpop.f32.mrb[0].mxu0
    %v1149 = vadd.f32 %v193, %v1148
    %v1150 = vpop.f32.mrb[0].mxu0
    %v1151 = vadd.f32 %v197, %v1150
    %v1152 = vpop.f32.mrb[0].mxu0
    %v1153 = vadd.f32 %v193, %v1152
    %v1154 = vpop.f32.mrb[0].mxu0
    %v1155 = vadd.f32 %v197, %v1154
    %1156 = vmatprep.mubr.bf16.mxu0 0
    %1157 = vmatmul.mubr.bf16.gmra.mrb[0].mxu0 %v502
    %v1158 = vpop.f32.mrb[0].mxu0
    %v1159 = vadd.f32 %v193, %v1158
    %v1160 = vpop.f32.mrb[0].mxu0
    %v1161 = vadd.f32 %v197, %v1160
    %v1162 = vpop.f32.mrb[0].mxu0
    %v1163 = vadd.f32 %v193, %v1162
    %v1164 = vpop.f32.mrb[0].mxu0
    %v1165 = vadd.f32 %v197, %v1164
    %1166 = vmatprep.mubr.bf16.mxu0 0
    %1167 = vmatmul.mubr.bf16.gmra.mrb[0].mxu0 %v503
    %v1168 = vpop.f32.mrb[0].mxu0
    %v1169 = vadd.f32 %v193, %v1168
    %v1170 = vpop.f32.mrb[0].mxu0
    %v1171 = vadd.f32 %v197, %v1170
    %v1172 = vpop.f32.mrb[0].mxu0
    %v1173 = vadd.f32 %v193, %v1172
    %v1174 = vpop.f32.mrb[0].mxu0
    %v1175 = vadd.f32 %v197, %v1174
    %1176 = vmatprep.mubr.bf16.mxu0 0
    %1177 = vmatmul.mubr.bf16.gmra.mrb[0].mxu0 %v504
    %v1178 = vpop.f32.mrb[0].mxu0
    %v1179 = vadd.f32 %v193, %v1178
    %v1180 = vpop.f32.mrb[0].mxu0
    %v1181 = vadd.f32 %v197, %v1180
    %v1182 = vpop.f32.mrb[0].mxu0
    %v1183 = vadd.f32 %v193, %v1182
    %v1184 = vpop.f32.mrb[0].mxu0
    %v1185 = vadd.f32 %v197, %v1184
    %1186 = vmatprep.mubr.bf16.mxu0 0
    %1187 = vmatmul.mubr.bf16.gmra.mrb[0].mxu0 %v505
    %v1188 = vpop.f32.mrb[0].mxu0
    %v1189 = vadd.f32 %v193, %v1188
    %v1190 = vpop.f32.mrb[0].mxu0
    %v1191 = vadd.f32 %v197, %v1190
    %v1192 = vpop.f32.mrb[0].mxu0
    %v1193 = vadd.f32 %v193, %v1192
    %v1194 = vpop.f32.mrb[0].mxu0
    %v1195 = vadd.f32 %v197, %v1194
    %1196 = vmatprep.mubr.bf16.mxu0 0
    %1197 = vmatmul.mubr.bf16.gmra.mrb[0].mxu0 %v506
    %v1198 = vpop.f32.mrb[0].mxu0
    %v1199 = vadd.f32 %v193, %v1198
    %v1200 = vpop.f32.mrb[0].mxu0
    %v1201 = vadd.f32 %v197, %v1200
    %v1202 = vpop.f32.mrb[0].mxu0
    %v1203 = vadd.f32 %v193, %v1202
    %v1204 = vpop.f32.mrb[0].mxu0
    %v1205 = vadd.f32 %v197, %v1204
    %1206 = vmatprep.mubr.bf16.mxu0 0
    %1207 = vmatmul.mubr.bf16.gmra.mrb[0].mxu0 %v507
    %v1208 = vpop.f32.mrb[0].mxu0
    %v1209 = vadd.f32 %v193, %v1208
    %v1210 = vpop.f32.mrb[0].mxu0
    %v1211 = vadd.f32 %v197, %v1210
    %v1212 = vpop.f32.mrb[0].mxu0
    %v1213 = vadd.f32 %v193, %v1212
    %v1214 = vpop.f32.mrb[0].mxu0
    %v1215 = vadd.f32 %v197, %v1214
    %1216 = vmatprep.mubr.bf16.mxu0 0
    %1217 = vmatmul.mubr.bf16.gmra.mrb[0].mxu0 %v508
    %v1218 = vpop.f32.mrb[0].mxu0
    %v1219 = vadd.f32 %v193, %v1218
    %v1220 = vpop.f32.mrb[0].mxu0
    %v1221 = vadd.f32 %v197, %v1220
    %v1222 = vpop.f32.mrb[0].mxu0
    %v1223 = vadd.f32 %v193, %v1222
    %v1224 = vpop.f32.mrb[0].mxu0
    %v1225 = vadd.f32 %v197, %v1224
    %1226 = vmatprep.mubr.bf16.mxu0 0
    %1227 = vmatmul.mubr.bf16.gmra.mrb[0].mxu0 %v509
    %v1228 = vpop.f32.mrb[0].mxu0
    %v1229 = vadd.f32 %v193, %v1228
    %v1230 = vpop.f32.mrb[0].mxu0
    %v1231 = vadd.f32 %v197, %v1230
    %v1232 = vpop.f32.mrb[0].mxu0
    %v1233 = vadd.f32 %v193, %v1232
    %v1234 = vpop.f32.mrb[0].mxu0
    %v1235 = vadd.f32 %v197, %v1234
    %1236 = vmatprep.mubr.bf16.mxu0 0
    %1237 = vmatmul.mubr.bf16.gmra.mrb[0].mxu0 %v510
    %v1238 = vpop.f32.mrb[0].mxu0
    %v1239 = vadd.f32 %v193, %v1238
    %v1240 = vpop.f32.mrb[0].mxu0
    %v1241 = vadd.f32 %v197, %v1240
    %v1242 = vpop.f32.mrb[0].mxu0
    %v1243 = vadd.f32 %v193, %v1242
    %v1244 = vpop.f32.mrb[0].mxu0
    %v1245 = vadd.f32 %v197, %v1244
    %1246 = vmatprep.mubr.bf16.mxu0 0
    %1247 = vmatmul.mubr.bf16.gmra.mrb[0].mxu0 %v511
    %v1248 = vpop.f32.mrb[0].mxu0
    %v1249 = vadd.f32 %v193, %v1248
    %v1250 = vpop.f32.mrb[0].mxu0
    %v1251 = vadd.f32 %v197, %v1250
    %v1252 = vpop.f32.mrb[0].mxu0
    %v1253 = vadd.f32 %v193, %v1252
    %v1254 = vpop.f32.mrb[0].mxu0
    %v1255 = vadd.f32 %v197, %v1254
    %1256 = vmatprep.mubr.bf16.mxu0 0
    %1257 = vmatmul.mubr.bf16.gmra.mrb[0].mxu0 %v512
    %v1258 = vpop.f32.mrb[0].mxu0
    %v1259 = vadd.f32 %v193, %v1258
    %v1260 = vpop.f32.mrb[0].mxu0
    %v1261 = vadd.f32 %v197, %v1260
    %v1262 = vpop.f32.mrb[0].mxu0
    %v1263 = vadd.f32 %v193, %v1262
    %v1264 = vpop.f32.mrb[0].mxu0
    %v1265 = vadd.f32 %v197, %v1264
    %1266 = vmatprep.mubr.bf16.mxu0 0
    %1267 = vmatmul.mubr.bf16.gmra.mrb[0].mxu0 %v513
    %v1268 = vpop.f32.mrb[0].mxu0
    %v1269 = vadd.f32 %v193, %v1268
    %v1270 = vpop.f32.mrb[0].mxu0
    %v1271 = vadd.f32 %v197, %v1270
    %v1272 = vpop.f32.mrb[0].mxu0
    %v1273 = vadd.f32 %v193, %v1272
    %v1274 = vpop.f32.mrb[0].mxu0
    %v1275 = vadd.f32 %v197, %v1274
    %1276 = vmatprep.mubr.bf16.mxu0 0
    %1277 = vmatmul.mubr.bf16.gmra.mrb[0].mxu0 %v514
    %v1278 = vpop.f32.mrb[0].mxu0
    %v1279 = vadd.f32 %v193, %v1278
    %v1280 = vpop.f32.mrb[0].mxu0
    %v1281 = vadd.f32 %v197, %v1280
    %v1282 = vpop.f32.mrb[0].mxu0
    %v1283 = vadd.f32 %v193, %v1282
    %v1284 = vpop.f32.mrb[0].mxu0
    %v1285 = vadd.f32 %v197, %v1284
    %1286 = vmatprep.mubr.bf16.mxu0 0
    %1287 = vmatmul.mubr.bf16.gmra.mrb[0].mxu0 %v515
    %v1288 = vpop.f32.mrb[0].mxu0
    %v1289 = vadd.f32 %v193, %v1288
    %v1290 = vpop.f32.mrb[0].mxu0
    %v1291 = vadd.f32 %v197, %v1290
    %v1292 = vpop.f32.mrb[0].mxu0
    %v1293 = vadd.f32 %v193, %v1292
    %v1294 = vpop.f32.mrb[0].mxu0
    %v1295 = vadd.f32 %v197, %v1294
    %1296 = vmatprep.mubr.bf16.mxu0 0
    %1297 = vmatmul.mubr.bf16.gmra.mrb[0].mxu0 %v516
    %v1298 = vpop.f32.mrb[0].mxu0
    %v1299 = vadd.f32 %v193, %v1298
    %v1300 = vpop.f32.mrb[0].mxu0
    %v1301 = vadd.f32 %v197, %v1300
    %v1302 = vpop.f32.mrb[0].mxu0
    %v1303 = vadd.f32 %v193, %v1302
    %v1304 = vpop.f32.mrb[0].mxu0
    %v1305 = vadd.f32 %v197, %v1304
    %1306 = vmatprep.mubr.bf16.mxu0 0
    %1307 = vmatmul.mubr.bf16.gmra.mrb[0].mxu0 %v517
    %v1308 = vpop.f32.mrb[0].mxu0
    %v1309 = vadd.f32 %v193, %v1308
    %v1310 = vpop.f32.mrb[0].mxu0
    %v1311 = vadd.f32 %v197, %v1310
    %v1312 = vpop.f32.mrb[0].mxu0
    %v1313 = vadd.f32 %v193, %v1312
    %v1314 = vpop.f32.mrb[0].mxu0
    %v1315 = vadd.f32 %v197, %v1314
    %1316 = vmatprep.mubr.bf16.mxu0 0
    %1317 = vmatmul.mubr.bf16.gmra.mrb[0].mxu0 %v518
    %v1318 = vpop.f32.mrb[0].mxu0
    %v1319 = vadd.f32 %v193, %v1318
    %v1320 = vpop.f32.mrb[0].mxu0
    %v1321 = vadd.f32 %v197, %v1320
    %v1322 = vpop.f32.mrb[0].mxu0
    %v1323 = vadd.f32 %v193, %v1322
    %v1324 = vpop.f32.mrb[0].mxu0
    %v1325 = vadd.f32 %v197, %v1324
    %1326 = vmatprep.mubr.bf16.mxu0 0
    %1327 = vmatmul.mubr.bf16.gmra.mrb[0].mxu0 %v519
    %v1328 = vpop.f32.mrb[0].mxu0
    %v1329 = vadd.f32 %v193, %v1328
    %v1330 = vpop.f32.mrb[0].mxu0
    %v1331 = vadd.f32 %v197, %v1330
    %v1332 = vpop.f32.mrb[0].mxu0
    %v1333 = vadd.f32 %v193, %v1332
    %v1334 = vpop.f32.mrb[0].mxu0
    %v1335 = vadd.f32 %v197, %v1334
    %1336 = vdwg.mxu0
    %v1337 = vpack.c.bf16 %v703, %v699
    %v1338 = vpack.c.bf16 %v705, %v701
    %v1339 = vpack.c.bf16 %v713, %v709
    %v1340 = vpack.c.bf16 %v715, %v711
    %v1341 = vpack.c.bf16 %v723, %v719
    %v1342 = vpack.c.bf16 %v725, %v721
    %v1343 = vpack.c.bf16 %v733, %v729
    %v1344 = vpack.c.bf16 %v735, %v731
    %v1345 = vpack.c.bf16 %v743, %v739
    %v1346 = vpack.c.bf16 %v745, %v741
    %v1347 = vpack.c.bf16 %v753, %v749
    %v1348 = vpack.c.bf16 %v755, %v751
    %v1349 = vpack.c.bf16 %v763, %v759
    %v1350 = vpack.c.bf16 %v765, %v761
    %v1351 = vpack.c.bf16 %v773, %v769
    %v1352 = vpack.c.bf16 %v775, %v771
    %v1353 = vpack.c.bf16 %v783, %v779
    %v1354 = vpack.c.bf16 %v785, %v781
    %v1355 = vpack.c.bf16 %v793, %v789
    %v1356 = vpack.c.bf16 %v795, %v791
    %v1357 = vpack.c.bf16 %v803, %v799
    %v1358 = vpack.c.bf16 %v805, %v801
    %v1359 = vpack.c.bf16 %v813, %v809
    %v1360 = vpack.c.bf16 %v815, %v811
    %v1361 = vpack.c.bf16 %v823, %v819
    %v1362 = vpack.c.bf16 %v825, %v821
    %v1363 = vpack.c.bf16 %v833, %v829
    %v1364 = vpack.c.bf16 %v835, %v831
    %v1365 = vpack.c.bf16 %v843, %v839
    %v1366 = vpack.c.bf16 %v845, %v841
    %v1367 = vpack.c.bf16 %v853, %v849
    %v1368 = vpack.c.bf16 %v855, %v851
    %v1369 = vpack.c.bf16 %v863, %v859
    %v1370 = vpack.c.bf16 %v865, %v861
    %v1371 = vpack.c.bf16 %v873, %v869
    %v1372 = vpack.c.bf16 %v875, %v871
    %v1373 = vpack.c.bf16 %v883, %v879
    %v1374 = vpack.c.bf16 %v885, %v881
    %v1375 = vpack.c.bf16 %v893, %v889
    %v1376 = vpack.c.bf16 %v895, %v891
    %v1377 = vpack.c.bf16 %v903, %v899
    %v1378 = vpack.c.bf16 %v905, %v901
    %v1379 = vpack.c.bf16 %v913, %v909
    %v1380 = vpack.c.bf16 %v915, %v911
    %v1381 = vpack.c.bf16 %v923, %v919
    %v1382 = vpack.c.bf16 %v925, %v921
    %v1383 = vpack.c.bf16 %v933, %v929
    %v1384 = vpack.c.bf16 %v935, %v931
    %v1385 = vpack.c.bf16 %v943, %v939
    %v1386 = vpack.c.bf16 %v945, %v941
    %v1387 = vpack.c.bf16 %v953, %v949
    %v1388 = vpack.c.bf16 %v955, %v951
    %v1389 = vpack.c.bf16 %v963, %v959
    %v1390 = vpack.c.bf16 %v965, %v961
    %v1391 = vpack.c.bf16 %v973, %v969
    %v1392 = vpack.c.bf16 %v975, %v971
    %v1393 = vpack.c.bf16 %v983, %v979
    %v1394 = vpack.c.bf16 %v985, %v981
    %v1395 = vpack.c.bf16 %v993, %v989
    %v1396 = vpack.c.bf16 %v995, %v991
    %v1397 = vpack.c.bf16 %v1003, %v999
    %v1398 = vpack.c.bf16 %v1005, %v1001
    %v1399 = vpack.c.bf16 %v1013, %v1009
    %v1400 = vpack.c.bf16 %v1015, %v1011
    %v1401 = vpack.c.bf16 %v1023, %v1019
    %v1402 = vpack.c.bf16 %v1025, %v1021
    %v1403 = vpack.c.bf16 %v1033, %v1029
    %v1404 = vpack.c.bf16 %v1035, %v1031
    %v1405 = vpack.c.bf16 %v1043, %v1039
    %v1406 = vpack.c.bf16 %v1045, %v1041
    %v1407 = vpack.c.bf16 %v1053, %v1049
    %v1408 = vpack.c.bf16 %v1055, %v1051
    %v1409 = vpack.c.bf16 %v1063, %v1059
    %v1410 = vpack.c.bf16 %v1065, %v1061
    %v1411 = vpack.c.bf16 %v1073, %v1069
    %v1412 = vpack.c.bf16 %v1075, %v1071
    %v1413 = vpack.c.bf16 %v1083, %v1079
    %v1414 = vpack.c.bf16 %v1085, %v1081
    %v1415 = vpack.c.bf16 %v1093, %v1089
    %v1416 = vpack.c.bf16 %v1095, %v1091
    %v1417 = vpack.c.bf16 %v1103, %v1099
    %v1418 = vpack.c.bf16 %v1105, %v1101
    %v1419 = vpack.c.bf16 %v1113, %v1109
    %v1420 = vpack.c.bf16 %v1115, %v1111
    %v1421 = vpack.c.bf16 %v1123, %v1119
    %v1422 = vpack.c.bf16 %v1125, %v1121
    %v1423 = vpack.c.bf16 %v1133, %v1129
    %v1424 = vpack.c.bf16 %v1135, %v1131
    %v1425 = vpack.c.bf16 %v1143, %v1139
    %v1426 = vpack.c.bf16 %v1145, %v1141
    %v1427 = vpack.c.bf16 %v1153, %v1149
    %v1428 = vpack.c.bf16 %v1155, %v1151
    %v1429 = vpack.c.bf16 %v1163, %v1159
    %v1430 = vpack.c.bf16 %v1165, %v1161
    %v1431 = vpack.c.bf16 %v1173, %v1169
    %v1432 = vpack.c.bf16 %v1175, %v1171
    %v1433 = vpack.c.bf16 %v1183, %v1179
    %v1434 = vpack.c.bf16 %v1185, %v1181
    %v1435 = vpack.c.bf16 %v1193, %v1189
    %v1436 = vpack.c.bf16 %v1195, %v1191
    %v1437 = vpack.c.bf16 %v1203, %v1199
    %v1438 = vpack.c.bf16 %v1205, %v1201
    %v1439 = vpack.c.bf16 %v1213, %v1209
    %v1440 = vpack.c.bf16 %v1215, %v1211
    %v1441 = vpack.c.bf16 %v1223, %v1219
    %v1442 = vpack.c.bf16 %v1225, %v1221
    %v1443 = vpack.c.bf16 %v1233, %v1229
    %v1444 = vpack.c.bf16 %v1235, %v1231
    %v1445 = vpack.c.bf16 %v1243, %v1239
    %v1446 = vpack.c.bf16 %v1245, %v1241
    %v1447 = vpack.c.bf16 %v1253, %v1249
    %v1448 = vpack.c.bf16 %v1255, %v1251
    %v1449 = vpack.c.bf16 %v1263, %v1259
    %v1450 = vpack.c.bf16 %v1265, %v1261
    %v1451 = vpack.c.bf16 %v1273, %v1269
    %v1452 = vpack.c.bf16 %v1275, %v1271
    %v1453 = vpack.c.bf16 %v1283, %v1279
    %v1454 = vpack.c.bf16 %v1285, %v1281
    %v1455 = vpack.c.bf16 %v1293, %v1289
    %v1456 = vpack.c.bf16 %v1295, %v1291
    %v1457 = vpack.c.bf16 %v1303, %v1299
    %v1458 = vpack.c.bf16 %v1305, %v1301
    %v1459 = vpack.c.bf16 %v1313, %v1309
    %v1460 = vpack.c.bf16 %v1315, %v1311
    %v1461 = vpack.c.bf16 %v1323, %v1319
    %v1462 = vpack.c.bf16 %v1325, %v1321
    %v1463 = vpack.c.bf16 %v1333, %v1329
    %v1464 = vpack.c.bf16 %v1335, %v1331
    %v1593 = vunpack.c.l.b16 %v1337
    %v1594 = vunpack.c.l.b16 %v1338
    %v1595 = vunpack.c.h.b16 %v1337
    %v1596 = vunpack.c.h.b16 %v1338
    %v1597 = vunpack.c.l.b16 %v1339
    %v1598 = vunpack.c.l.b16 %v1340
    %v1599 = vunpack.c.h.b16 %v1339
    %v1600 = vunpack.c.h.b16 %v1340
    %v1601 = vunpack.c.l.b16 %v1341
    %v1602 = vunpack.c.l.b16 %v1342
    %v1603 = vunpack.c.h.b16 %v1341
    %v1604 = vunpack.c.h.b16 %v1342
    %v1605 = vunpack.c.l.b16 %v1343
    %v1606 = vunpack.c.l.b16 %v1344
    %v1607 = vunpack.c.h.b16 %v1343
    %v1608 = vunpack.c.h.b16 %v1344
    %v1609 = vunpack.c.l.b16 %v1345
    %v1610 = vunpack.c.l.b16 %v1346
    %v1611 = vunpack.c.h.b16 %v1345
    %v1612 = vunpack.c.h.b16 %v1346
    %v1613 = vunpack.c.l.b16 %v1347
    %v1614 = vunpack.c.l.b16 %v1348
    %v1615 = vunpack.c.h.b16 %v1347
    %v1616 = vunpack.c.h.b16 %v1348
    %v1617 = vunpack.c.l.b16 %v1349
    %v1618 = vunpack.c.l.b16 %v1350
    %v1619 = vunpack.c.h.b16 %v1349
    %v1620 = vunpack.c.h.b16 %v1350
    %v1621 = vunpack.c.l.b16 %v1351
    %v1622 = vunpack.c.l.b16 %v1352
    %v1623 = vunpack.c.h.b16 %v1351
    %v1624 = vunpack.c.h.b16 %v1352
    %v1625 = vunpack.c.l.b16 %v1353
    %v1626 = vunpack.c.l.b16 %v1354
    %v1627 = vunpack.c.h.b16 %v1353
    %v1628 = vunpack.c.h.b16 %v1354
    %v1629 = vunpack.c.l.b16 %v1355
    %v1630 = vunpack.c.l.b16 %v1356
    %v1631 = vunpack.c.h.b16 %v1355
    %v1632 = vunpack.c.h.b16 %v1356
    %v1633 = vunpack.c.l.b16 %v1357
    %v1634 = vunpack.c.l.b16 %v1358
    %v1635 = vunpack.c.h.b16 %v1357
    %v1636 = vunpack.c.h.b16 %v1358
    %v1637 = vunpack.c.l.b16 %v1359
    %v1638 = vunpack.c.l.b16 %v1360
    %v1639 = vunpack.c.h.b16 %v1359
    %v1640 = vunpack.c.h.b16 %v1360
    %v1641 = vunpack.c.l.b16 %v1361
    %v1642 = vunpack.c.l.b16 %v1362
    %v1643 = vunpack.c.h.b16 %v1361
    %v1644 = vunpack.c.h.b16 %v1362
    %v1645 = vunpack.c.l.b16 %v1363
    %v1646 = vunpack.c.l.b16 %v1364
    %v1647 = vunpack.c.h.b16 %v1363
    %v1648 = vunpack.c.h.b16 %v1364
    %v1649 = vunpack.c.l.b16 %v1365
    %v1650 = vunpack.c.l.b16 %v1366
    %v1651 = vunpack.c.h.b16 %v1365
    %v1652 = vunpack.c.h.b16 %v1366
    %v1653 = vunpack.c.l.b16 %v1367
    %v1654 = vunpack.c.l.b16 %v1368
    %v1655 = vunpack.c.h.b16 %v1367
    %v1656 = vunpack.c.h.b16 %v1368
    %v1657 = vunpack.c.l.b16 %v1369
    %v1658 = vunpack.c.l.b16 %v1370
    %v1659 = vunpack.c.h.b16 %v1369
    %v1660 = vunpack.c.h.b16 %v1370
    %v1661 = vunpack.c.l.b16 %v1371
    %v1662 = vunpack.c.l.b16 %v1372
    %v1663 = vunpack.c.h.b16 %v1371
    %v1664 = vunpack.c.h.b16 %v1372
    %v1665 = vunpack.c.l.b16 %v1373
    %v1666 = vunpack.c.l.b16 %v1374
    %v1667 = vunpack.c.h.b16 %v1373
    %v1668 = vunpack.c.h.b16 %v1374
    %v1669 = vunpack.c.l.b16 %v1375
    %v1670 = vunpack.c.l.b16 %v1376
    %v1671 = vunpack.c.h.b16 %v1375
    %v1672 = vunpack.c.h.b16 %v1376
    %v1673 = vunpack.c.l.b16 %v1377
    %v1674 = vunpack.c.l.b16 %v1378
    %v1675 = vunpack.c.h.b16 %v1377
    %v1676 = vunpack.c.h.b16 %v1378
    %v1677 = vunpack.c.l.b16 %v1379
    %v1678 = vunpack.c.l.b16 %v1380
    %v1679 = vunpack.c.h.b16 %v1379
    %v1680 = vunpack.c.h.b16 %v1380
    %v1681 = vunpack.c.l.b16 %v1381
    %v1682 = vunpack.c.l.b16 %v1382
    %v1683 = vunpack.c.h.b16 %v1381
    %v1684 = vunpack.c.h.b16 %v1382
    %v1685 = vunpack.c.l.b16 %v1383
    %v1686 = vunpack.c.l.b16 %v1384
    %v1687 = vunpack.c.h.b16 %v1383
    %v1688 = vunpack.c.h.b16 %v1384
    %v1689 = vunpack.c.l.b16 %v1385
    %v1690 = vunpack.c.l.b16 %v1386
    %v1691 = vunpack.c.h.b16 %v1385
    %v1692 = vunpack.c.h.b16 %v1386
    %v1693 = vunpack.c.l.b16 %v1387
    %v1694 = vunpack.c.l.b16 %v1388
    %v1695 = vunpack.c.h.b16 %v1387
    %v1696 = vunpack.c.h.b16 %v1388
    %v1697 = vunpack.c.l.b16 %v1389
    %v1698 = vunpack.c.l.b16 %v1390
    %v1699 = vunpack.c.h.b16 %v1389
    %v1700 = vunpack.c.h.b16 %v1390
    %v1701 = vunpack.c.l.b16 %v1391
    %v1702 = vunpack.c.l.b16 %v1392
    %v1703 = vunpack.c.h.b16 %v1391
    %v1704 = vunpack.c.h.b16 %v1392
    %v1705 = vunpack.c.l.b16 %v1393
    %v1706 = vunpack.c.l.b16 %v1394
    %v1707 = vunpack.c.h.b16 %v1393
    %v1708 = vunpack.c.h.b16 %v1394
    %v1709 = vunpack.c.l.b16 %v1395
    %v1710 = vunpack.c.l.b16 %v1396
    %v1711 = vunpack.c.h.b16 %v1395
    %v1712 = vunpack.c.h.b16 %v1396
    %v1713 = vunpack.c.l.b16 %v1397
    %v1714 = vunpack.c.l.b16 %v1398
    %v1715 = vunpack.c.h.b16 %v1397
    %v1716 = vunpack.c.h.b16 %v1398
    %v1717 = vunpack.c.l.b16 %v1399
    %v1718 = vunpack.c.l.b16 %v1400
    %v1719 = vunpack.c.h.b16 %v1399
    %v1720 = vunpack.c.h.b16 %v1400
    %v1721 = vunpack.c.l.b16 %v1401
    %v1722 = vunpack.c.l.b16 %v1402
    %v1723 = vunpack.c.h.b16 %v1401
    %v1724 = vunpack.c.h.b16 %v1402
    %v1725 = vunpack.c.l.b16 %v1403
    %v1726 = vunpack.c.l.b16 %v1404
    %v1727 = vunpack.c.h.b16 %v1403
    %v1728 = vunpack.c.h.b16 %v1404
    %v1729 = vunpack.c.l.b16 %v1405
    %v1730 = vunpack.c.l.b16 %v1406
    %v1731 = vunpack.c.h.b16 %v1405
    %v1732 = vunpack.c.h.b16 %v1406
    %v1733 = vunpack.c.l.b16 %v1407
    %v1734 = vunpack.c.l.b16 %v1408
    %v1735 = vunpack.c.h.b16 %v1407
    %v1736 = vunpack.c.h.b16 %v1408
    %v1737 = vunpack.c.l.b16 %v1409
    %v1738 = vunpack.c.l.b16 %v1410
    %v1739 = vunpack.c.h.b16 %v1409
    %v1740 = vunpack.c.h.b16 %v1410
    %v1741 = vunpack.c.l.b16 %v1411
    %v1742 = vunpack.c.l.b16 %v1412
    %v1743 = vunpack.c.h.b16 %v1411
    %v1744 = vunpack.c.h.b16 %v1412
    %v1745 = vunpack.c.l.b16 %v1413
    %v1746 = vunpack.c.l.b16 %v1414
    %v1747 = vunpack.c.h.b16 %v1413
    %v1748 = vunpack.c.h.b16 %v1414
    %v1749 = vunpack.c.l.b16 %v1415
    %v1750 = vunpack.c.l.b16 %v1416
    %v1751 = vunpack.c.h.b16 %v1415
    %v1752 = vunpack.c.h.b16 %v1416
    %v1753 = vunpack.c.l.b16 %v1417
    %v1754 = vunpack.c.l.b16 %v1418
    %v1755 = vunpack.c.h.b16 %v1417
    %v1756 = vunpack.c.h.b16 %v1418
    %v1757 = vunpack.c.l.b16 %v1419
    %v1758 = vunpack.c.l.b16 %v1420
    %v1759 = vunpack.c.h.b16 %v1419
    %v1760 = vunpack.c.h.b16 %v1420
    %v1761 = vunpack.c.l.b16 %v1421
    %v1762 = vunpack.c.l.b16 %v1422
    %v1763 = vunpack.c.h.b16 %v1421
    %v1764 = vunpack.c.h.b16 %v1422
    %v1765 = vunpack.c.l.b16 %v1423
    %v1766 = vunpack.c.l.b16 %v1424
    %v1767 = vunpack.c.h.b16 %v1423
    %v1768 = vunpack.c.h.b16 %v1424
    %v1769 = vunpack.c.l.b16 %v1425
    %v1770 = vunpack.c.l.b16 %v1426
    %v1771 = vunpack.c.h.b16 %v1425
    %v1772 = vunpack.c.h.b16 %v1426
    %v1773 = vunpack.c.l.b16 %v1427
    %v1774 = vunpack.c.l.b16 %v1428
    %v1775 = vunpack.c.h.b16 %v1427
    %v1776 = vunpack.c.h.b16 %v1428
    %v1777 = vunpack.c.l.b16 %v1429
    %v1778 = vunpack.c.l.b16 %v1430
    %v1779 = vunpack.c.h.b16 %v1429
    %v1780 = vunpack.c.h.b16 %v1430
    %v1781 = vunpack.c.l.b16 %v1431
    %v1782 = vunpack.c.l.b16 %v1432
    %v1783 = vunpack.c.h.b16 %v1431
    %v1784 = vunpack.c.h.b16 %v1432
    %v1785 = vunpack.c.l.b16 %v1433
    %v1786 = vunpack.c.l.b16 %v1434
    %v1787 = vunpack.c.h.b16 %v1433
    %v1788 = vunpack.c.h.b16 %v1434
    %v1789 = vunpack.c.l.b16 %v1435
    %v1790 = vunpack.c.l.b16 %v1436
    %v1791 = vunpack.c.h.b16 %v1435
    %v1792 = vunpack.c.h.b16 %v1436
    %v1793 = vunpack.c.l.b16 %v1437
    %v1794 = vunpack.c.l.b16 %v1438
    %v1795 = vunpack.c.h.b16 %v1437
    %v1796 = vunpack.c.h.b16 %v1438
    %v1797 = vunpack.c.l.b16 %v1439
    %v1798 = vunpack.c.l.b16 %v1440
    %v1799 = vunpack.c.h.b16 %v1439
    %v1800 = vunpack.c.h.b16 %v1440
    %v1801 = vunpack.c.l.b16 %v1441
    %v1802 = vunpack.c.l.b16 %v1442
    %v1803 = vunpack.c.h.b16 %v1441
    %v1804 = vunpack.c.h.b16 %v1442
    %v1805 = vunpack.c.l.b16 %v1443
    %v1806 = vunpack.c.l.b16 %v1444
    %v1807 = vunpack.c.h.b16 %v1443
    %v1808 = vunpack.c.h.b16 %v1444
    %v1809 = vunpack.c.l.b16 %v1445
    %v1810 = vunpack.c.l.b16 %v1446
    %v1811 = vunpack.c.h.b16 %v1445
    %v1812 = vunpack.c.h.b16 %v1446
    %v1813 = vunpack.c.l.b16 %v1447
    %v1814 = vunpack.c.l.b16 %v1448
    %v1815 = vunpack.c.h.b16 %v1447
    %v1816 = vunpack.c.h.b16 %v1448
    %v1817 = vunpack.c.l.b16 %v1449
    %v1818 = vunpack.c.l.b16 %v1450
    %v1819 = vunpack.c.h.b16 %v1449
    %v1820 = vunpack.c.h.b16 %v1450
    %v1821 = vunpack.c.l.b16 %v1451
    %v1822 = vunpack.c.l.b16 %v1452
    %v1823 = vunpack.c.h.b16 %v1451
    %v1824 = vunpack.c.h.b16 %v1452
    %v1825 = vunpack.c.l.b16 %v1453
    %v1826 = vunpack.c.l.b16 %v1454
    %v1827 = vunpack.c.h.b16 %v1453
    %v1828 = vunpack.c.h.b16 %v1454
    %v1829 = vunpack.c.l.b16 %v1455
    %v1830 = vunpack.c.l.b16 %v1456
    %v1831 = vunpack.c.h.b16 %v1455
    %v1832 = vunpack.c.h.b16 %v1456
    %v1833 = vunpack.c.l.b16 %v1457
    %v1834 = vunpack.c.l.b16 %v1458
    %v1835 = vunpack.c.h.b16 %v1457
    %v1836 = vunpack.c.h.b16 %v1458
    %v1837 = vunpack.c.l.b16 %v1459
    %v1838 = vunpack.c.l.b16 %v1460
    %v1839 = vunpack.c.h.b16 %v1459
    %v1840 = vunpack.c.h.b16 %v1460
    %v1841 = vunpack.c.l.b16 %v1461
    %v1842 = vunpack.c.l.b16 %v1462
    %v1843 = vunpack.c.h.b16 %v1461
    %v1844 = vunpack.c.h.b16 %v1462
    %v1845 = vunpack.c.l.b16 %v1463
    %v1846 = vunpack.c.l.b16 %v1464
    %v1847 = vunpack.c.h.b16 %v1463
    %v1848 = vunpack.c.h.b16 %v1464
    %v1849 = vpack.c.b16 %v1594, %v1593
    %v1850 = vpack.c.b16 %v1596, %v1595
    %v1851 = vpack.c.b16 %v1598, %v1597
    %v1852 = vpack.c.b16 %v1600, %v1599
    %v1853 = vpack.c.b16 %v1602, %v1601
    %v1854 = vpack.c.b16 %v1604, %v1603
    %v1855 = vpack.c.b16 %v1606, %v1605
    %v1856 = vpack.c.b16 %v1608, %v1607
    %v1857 = vpack.c.b16 %v1610, %v1609
    %v1858 = vpack.c.b16 %v1612, %v1611
    %v1859 = vpack.c.b16 %v1614, %v1613
    %v1860 = vpack.c.b16 %v1616, %v1615
    %v1861 = vpack.c.b16 %v1618, %v1617
    %v1862 = vpack.c.b16 %v1620, %v1619
    %v1863 = vpack.c.b16 %v1622, %v1621
    %v1864 = vpack.c.b16 %v1624, %v1623
    %v1865 = vpack.c.b16 %v1626, %v1625
    %v1866 = vpack.c.b16 %v1628, %v1627
    %v1867 = vpack.c.b16 %v1630, %v1629
    %v1868 = vpack.c.b16 %v1632, %v1631
    %v1869 = vpack.c.b16 %v1634, %v1633
    %v1870 = vpack.c.b16 %v1636, %v1635
    %v1871 = vpack.c.b16 %v1638, %v1637
    %v1872 = vpack.c.b16 %v1640, %v1639
    %v1873 = vpack.c.b16 %v1642, %v1641
    %v1874 = vpack.c.b16 %v1644, %v1643
    %v1875 = vpack.c.b16 %v1646, %v1645
    %v1876 = vpack.c.b16 %v1648, %v1647
    %v1877 = vpack.c.b16 %v1650, %v1649
    %v1878 = vpack.c.b16 %v1652, %v1651
    %v1879 = vpack.c.b16 %v1654, %v1653
    %v1880 = vpack.c.b16 %v1656, %v1655
    %v1881 = vpack.c.b16 %v1658, %v1657
    %v1882 = vpack.c.b16 %v1660, %v1659
    %v1883 = vpack.c.b16 %v1662, %v1661
    %v1884 = vpack.c.b16 %v1664, %v1663
    %v1885 = vpack.c.b16 %v1666, %v1665
    %v1886 = vpack.c.b16 %v1668, %v1667
    %v1887 = vpack.c.b16 %v1670, %v1669
    %v1888 = vpack.c.b16 %v1672, %v1671
    %v1889 = vpack.c.b16 %v1674, %v1673
    %v1890 = vpack.c.b16 %v1676, %v1675
    %v1891 = vpack.c.b16 %v1678, %v1677
    %v1892 = vpack.c.b16 %v1680, %v1679
    %v1893 = vpack.c.b16 %v1682, %v1681
    %v1894 = vpack.c.b16 %v1684, %v1683
    %v1895 = vpack.c.b16 %v1686, %v1685
    %v1896 = vpack.c.b16 %v1688, %v1687
    %v1897 = vpack.c.b16 %v1690, %v1689
    %v1898 = vpack.c.b16 %v1692, %v1691
    %v1899 = vpack.c.b16 %v1694, %v1693
    %v1900 = vpack.c.b16 %v1696, %v1695
    %v1901 = vpack.c.b16 %v1698, %v1697
    %v1902 = vpack.c.b16 %v1700, %v1699
    %v1903 = vpack.c.b16 %v1702, %v1701
    %v1904 = vpack.c.b16 %v1704, %v1703
    %v1905 = vpack.c.b16 %v1706, %v1705
    %v1906 = vpack.c.b16 %v1708, %v1707
    %v1907 = vpack.c.b16 %v1710, %v1709
    %v1908 = vpack.c.b16 %v1712, %v1711
    %v1909 = vpack.c.b16 %v1714, %v1713
    %v1910 = vpack.c.b16 %v1716, %v1715
    %v1911 = vpack.c.b16 %v1718, %v1717
    %v1912 = vpack.c.b16 %v1720, %v1719
    %v1913 = vpack.c.b16 %v1722, %v1721
    %v1914 = vpack.c.b16 %v1724, %v1723
    %v1915 = vpack.c.b16 %v1726, %v1725
    %v1916 = vpack.c.b16 %v1728, %v1727
    %v1917 = vpack.c.b16 %v1730, %v1729
    %v1918 = vpack.c.b16 %v1732, %v1731
    %v1919 = vpack.c.b16 %v1734, %v1733
    %v1920 = vpack.c.b16 %v1736, %v1735
    %v1921 = vpack.c.b16 %v1738, %v1737
    %v1922 = vpack.c.b16 %v1740, %v1739
    %v1923 = vpack.c.b16 %v1742, %v1741
    %v1924 = vpack.c.b16 %v1744, %v1743
    %v1925 = vpack.c.b16 %v1746, %v1745
    %v1926 = vpack.c.b16 %v1748, %v1747
    %v1927 = vpack.c.b16 %v1750, %v1749
    %v1928 = vpack.c.b16 %v1752, %v1751
    %v1929 = vpack.c.b16 %v1754, %v1753
    %v1930 = vpack.c.b16 %v1756, %v1755
    %v1931 = vpack.c.b16 %v1758, %v1757
    %v1932 = vpack.c.b16 %v1760, %v1759
    %v1933 = vpack.c.b16 %v1762, %v1761
    %v1934 = vpack.c.b16 %v1764, %v1763
    %v1935 = vpack.c.b16 %v1766, %v1765
    %v1936 = vpack.c.b16 %v1768, %v1767
    %v1937 = vpack.c.b16 %v1770, %v1769
    %v1938 = vpack.c.b16 %v1772, %v1771
    %v1939 = vpack.c.b16 %v1774, %v1773
    %v1940 = vpack.c.b16 %v1776, %v1775
    %v1941 = vpack.c.b16 %v1778, %v1777
    %v1942 = vpack.c.b16 %v1780, %v1779
    %v1943 = vpack.c.b16 %v1782, %v1781
    %v1944 = vpack.c.b16 %v1784, %v1783
    %v1945 = vpack.c.b16 %v1786, %v1785
    %v1946 = vpack.c.b16 %v1788, %v1787
    %v1947 = vpack.c.b16 %v1790, %v1789
    %v1948 = vpack.c.b16 %v1792, %v1791
    %v1949 = vpack.c.b16 %v1794, %v1793
    %v1950 = vpack.c.b16 %v1796, %v1795
    %v1951 = vpack.c.b16 %v1798, %v1797
    %v1952 = vpack.c.b16 %v1800, %v1799
    %v1953 = vpack.c.b16 %v1802, %v1801
    %v1954 = vpack.c.b16 %v1804, %v1803
    %v1955 = vpack.c.b16 %v1806, %v1805
    %v1956 = vpack.c.b16 %v1808, %v1807
    %v1957 = vpack.c.b16 %v1810, %v1809
    %v1958 = vpack.c.b16 %v1812, %v1811
    %v1959 = vpack.c.b16 %v1814, %v1813
    %v1960 = vpack.c.b16 %v1816, %v1815
    %v1961 = vpack.c.b16 %v1818, %v1817
    %v1962 = vpack.c.b16 %v1820, %v1819
    %v1963 = vpack.c.b16 %v1822, %v1821
    %v1964 = vpack.c.b16 %v1824, %v1823
    %v1965 = vpack.c.b16 %v1826, %v1825
    %v1966 = vpack.c.b16 %v1828, %v1827
    %v1967 = vpack.c.b16 %v1830, %v1829
    %v1968 = vpack.c.b16 %v1832, %v1831
    %v1969 = vpack.c.b16 %v1834, %v1833
    %v1970 = vpack.c.b16 %v1836, %v1835
    %v1971 = vpack.c.b16 %v1838, %v1837
    %v1972 = vpack.c.b16 %v1840, %v1839
    %v1973 = vpack.c.b16 %v1842, %v1841
    %v1974 = vpack.c.b16 %v1844, %v1843
    %v1975 = vpack.c.b16 %v1846, %v1845
    %v1976 = vpack.c.b16 %v1848, %v1847
    %2105 = vst [vmem:[#allocation7] sm:$0xff] %v1849
    %2106 = vst [vmem:[#allocation7 + $0x8] sm:$0xff] %v1850
    %2107 = vst [vmem:[#allocation7 + $0x10] sm:$0xff] %v1851
    %2108 = vst [vmem:[#allocation7 + $0x18] sm:$0xff] %v1852
    %2109 = vst [vmem:[#allocation7 + $0x20] sm:$0xff] %v1853
    %2110 = vst [vmem:[#allocation7 + $0x28] sm:$0xff] %v1854
    %2111 = vst [vmem:[#allocation7 + $0x30] sm:$0xff] %v1855
    %2112 = vst [vmem:[#allocation7 + $0x38] sm:$0xff] %v1856
    %2113 = vst [vmem:[#allocation7 + $0x40] sm:$0xff] %v1857
    %2114 = vst [vmem:[#allocation7 + $0x48] sm:$0xff] %v1858
    %2115 = vst [vmem:[#allocation7 + $0x50] sm:$0xff] %v1859
    %2116 = vst [vmem:[#allocation7 + $0x58] sm:$0xff] %v1860
    %2117 = vst [vmem:[#allocation7 + $0x60] sm:$0xff] %v1861
    %2118 = vst [vmem:[#allocation7 + $0x68] sm:$0xff] %v1862
    %2119 = vst [vmem:[#allocation7 + $0x70] sm:$0xff] %v1863
    %2120 = vst [vmem:[#allocation7 + $0x78] sm:$0xff] %v1864
    %2121 = vst [vmem:[#allocation7 + $0x80] sm:$0xff] %v1865
    %2122 = vst [vmem:[#allocation7 + $0x88] sm:$0xff] %v1866
    %2123 = vst [vmem:[#allocation7 + $0x90] sm:$0xff] %v1867
    %2124 = vst [vmem:[#allocation7 + $0x98] sm:$0xff] %v1868
    %2125 = vst [vmem:[#allocation7 + $0xa0] sm:$0xff] %v1869
    %2126 = vst [vmem:[#allocation7 + $0xa8] sm:$0xff] %v1870
    %2127 = vst [vmem:[#allocation7 + $0xb0] sm:$0xff] %v1871
    %2128 = vst [vmem:[#allocation7 + $0xb8] sm:$0xff] %v1872
    %2129 = vst [vmem:[#allocation7 + $0xc0] sm:$0xff] %v1873
    %2130 = vst [vmem:[#allocation7 + $0xc8] sm:$0xff] %v1874
    %2131 = vst [vmem:[#allocation7 + $0xd0] sm:$0xff] %v1875
    %2132 = vst [vmem:[#allocation7 + $0xd8] sm:$0xff] %v1876
    %2133 = vst [vmem:[#allocation7 + $0xe0] sm:$0xff] %v1877
    %2134 = vst [vmem:[#allocation7 + $0xe8] sm:$0xff] %v1878
    %2135 = vst [vmem:[#allocation7 + $0xf0] sm:$0xff] %v1879
    %2136 = vst [vmem:[#allocation7 + $0xf8] sm:$0xff] %v1880
    %2137 = vst [vmem:[#allocation7 + $0x100] sm:$0xff] %v1881
    %2138 = vst [vmem:[#allocation7 + $0x108] sm:$0xff] %v1882
    %2139 = vst [vmem:[#allocation7 + $0x110] sm:$0xff] %v1883
    %2140 = vst [vmem:[#allocation7 + $0x118] sm:$0xff] %v1884
    %2141 = vst [vmem:[#allocation7 + $0x120] sm:$0xff] %v1885
    %2142 = vst [vmem:[#allocation7 + $0x128] sm:$0xff] %v1886
    %2143 = vst [vmem:[#allocation7 + $0x130] sm:$0xff] %v1887
    %2144 = vst [vmem:[#allocation7 + $0x138] sm:$0xff] %v1888
    %2145 = vst [vmem:[#allocation7 + $0x140] sm:$0xff] %v1889
    %2146 = vst [vmem:[#allocation7 + $0x148] sm:$0xff] %v1890
    %2147 = vst [vmem:[#allocation7 + $0x150] sm:$0xff] %v1891
    %2148 = vst [vmem:[#allocation7 + $0x158] sm:$0xff] %v1892
    %2149 = vst [vmem:[#allocation7 + $0x160] sm:$0xff] %v1893
    %2150 = vst [vmem:[#allocation7 + $0x168] sm:$0xff] %v1894
    %2151 = vst [vmem:[#allocation7 + $0x170] sm:$0xff] %v1895
    %2152 = vst [vmem:[#allocation7 + $0x178] sm:$0xff] %v1896
    %2153 = vst [vmem:[#allocation7 + $0x180] sm:$0xff] %v1897
    %2154 = vst [vmem:[#allocation7 + $0x188] sm:$0xff] %v1898
    %2155 = vst [vmem:[#allocation7 + $0x190] sm:$0xff] %v1899
    %2156 = vst [vmem:[#allocation7 + $0x198] sm:$0xff] %v1900
    %2157 = vst [vmem:[#allocation7 + $0x1a0] sm:$0xff] %v1901
    %2158 = vst [vmem:[#allocation7 + $0x1a8] sm:$0xff] %v1902
    %2159 = vst [vmem:[#allocation7 + $0x1b0] sm:$0xff] %v1903
    %2160 = vst [vmem:[#allocation7 + $0x1b8] sm:$0xff] %v1904
    %2161 = vst [vmem:[#allocation7 + $0x1c0] sm:$0xff] %v1905
    %2162 = vst [vmem:[#allocation7 + $0x1c8] sm:$0xff] %v1906
    %2163 = vst [vmem:[#allocation7 + $0x1d0] sm:$0xff] %v1907
    %2164 = vst [vmem:[#allocation7 + $0x1d8] sm:$0xff] %v1908
    %2165 = vst [vmem:[#allocation7 + $0x1e0] sm:$0xff] %v1909
    %2166 = vst [vmem:[#allocation7 + $0x1e8] sm:$0xff] %v1910
    %2167 = vst [vmem:[#allocation7 + $0x1f0] sm:$0xff] %v1911
    %2168 = vst [vmem:[#allocation7 + $0x1f8] sm:$0xff] %v1912
    %2169 = vst [vmem:[#allocation7 + $0x200] sm:$0xff] %v1913
    %2170 = vst [vmem:[#allocation7 + $0x208] sm:$0xff] %v1914
    %2171 = vst [vmem:[#allocation7 + $0x210] sm:$0xff] %v1915
    %2172 = vst [vmem:[#allocation7 + $0x218] sm:$0xff] %v1916
    %2173 = vst [vmem:[#allocation7 + $0x220] sm:$0xff] %v1917
    %2174 = vst [vmem:[#allocation7 + $0x228] sm:$0xff] %v1918
    %2175 = vst [vmem:[#allocation7 + $0x230] sm:$0xff] %v1919
    %2176 = vst [vmem:[#allocation7 + $0x238] sm:$0xff] %v1920
    %2177 = vst [vmem:[#allocation7 + $0x240] sm:$0xff] %v1921
    %2178 = vst [vmem:[#allocation7 + $0x248] sm:$0xff] %v1922
    %2179 = vst [vmem:[#allocation7 + $0x250] sm:$0xff] %v1923
    %2180 = vst [vmem:[#allocation7 + $0x258] sm:$0xff] %v1924
    %2181 = vst [vmem:[#allocation7 + $0x260] sm:$0xff] %v1925
    %2182 = vst [vmem:[#allocation7 + $0x268] sm:$0xff] %v1926
    %2183 = vst [vmem:[#allocation7 + $0x270] sm:$0xff] %v1927
    %2184 = vst [vmem:[#allocation7 + $0x278] sm:$0xff] %v1928
    %2185 = vst [vmem:[#allocation7 + $0x280] sm:$0xff] %v1929
    %2186 = vst [vmem:[#allocation7 + $0x288] sm:$0xff] %v1930
    %2187 = vst [vmem:[#allocation7 + $0x290] sm:$0xff] %v1931
    %2188 = vst [vmem:[#allocation7 + $0x298] sm:$0xff] %v1932
    %2189 = vst [vmem:[#allocation7 + $0x2a0] sm:$0xff] %v1933
    %2190 = vst [vmem:[#allocation7 + $0x2a8] sm:$0xff] %v1934
    %2191 = vst [vmem:[#allocation7 + $0x2b0] sm:$0xff] %v1935
    %2192 = vst [vmem:[#allocation7 + $0x2b8] sm:$0xff] %v1936
    %2193 = vst [vmem:[#allocation7 + $0x2c0] sm:$0xff] %v1937
    %2194 = vst [vmem:[#allocation7 + $0x2c8] sm:$0xff] %v1938
    %2195 = vst [vmem:[#allocation7 + $0x2d0] sm:$0xff] %v1939
    %2196 = vst [vmem:[#allocation7 + $0x2d8] sm:$0xff] %v1940
    %2197 = vst [vmem:[#allocation7 + $0x2e0] sm:$0xff] %v1941
    %2198 = vst [vmem:[#allocation7 + $0x2e8] sm:$0xff] %v1942
    %2199 = vst [vmem:[#allocation7 + $0x2f0] sm:$0xff] %v1943
    %2200 = vst [vmem:[#allocation7 + $0x2f8] sm:$0xff] %v1944
    %2201 = vst [vmem:[#allocation7 + $0x300] sm:$0xff] %v1945
    %2202 = vst [vmem:[#allocation7 + $0x308] sm:$0xff] %v1946
    %2203 = vst [vmem:[#allocation7 + $0x310] sm:$0xff] %v1947
    %2204 = vst [vmem:[#allocation7 + $0x318] sm:$0xff] %v1948
    %2205 = vst [vmem:[#allocation7 + $0x320] sm:$0xff] %v1949
    %2206 = vst [vmem:[#allocation7 + $0x328] sm:$0xff] %v1950
    %2207 = vst [vmem:[#allocation7 + $0x330] sm:$0xff] %v1951
    %2208 = vst [vmem:[#allocation7 + $0x338] sm:$0xff] %v1952
    %2209 = vst [vmem:[#allocation7 + $0x340] sm:$0xff] %v1953
    %2210 = vst [vmem:[#allocation7 + $0x348] sm:$0xff] %v1954
    %2211 = vst [vmem:[#allocation7 + $0x350] sm:$0xff] %v1955
    %2212 = vst [vmem:[#allocation7 + $0x358] sm:$0xff] %v1956
    %2213 = vst [vmem:[#allocation7 + $0x360] sm:$0xff] %v1957
    %2214 = vst [vmem:[#allocation7 + $0x368] sm:$0xff] %v1958
    %2215 = vst [vmem:[#allocation7 + $0x370] sm:$0xff] %v1959
    %2216 = vst [vmem:[#allocation7 + $0x378] sm:$0xff] %v1960
    %2217 = vst [vmem:[#allocation7 + $0x380] sm:$0xff] %v1961
    %2218 = vst [vmem:[#allocation7 + $0x388] sm:$0xff] %v1962
    %2219 = vst [vmem:[#allocation7 + $0x390] sm:$0xff] %v1963
    %2220 = vst [vmem:[#allocation7 + $0x398] sm:$0xff] %v1964
    %2221 = vst [vmem:[#allocation7 + $0x3a0] sm:$0xff] %v1965
    %2222 = vst [vmem:[#allocation7 + $0x3a8] sm:$0xff] %v1966
    %2223 = vst [vmem:[#allocation7 + $0x3b0] sm:$0xff] %v1967
    %2224 = vst [vmem:[#allocation7 + $0x3b8] sm:$0xff] %v1968
    %2225 = vst [vmem:[#allocation7 + $0x3c0] sm:$0xff] %v1969
    %2226 = vst [vmem:[#allocation7 + $0x3c8] sm:$0xff] %v1970
    %2227 = vst [vmem:[#allocation7 + $0x3d0] sm:$0xff] %v1971
    %2228 = vst [vmem:[#allocation7 + $0x3d8] sm:$0xff] %v1972
    %2229 = vst [vmem:[#allocation7 + $0x3e0] sm:$0xff] %v1973
    %2230 = vst [vmem:[#allocation7 + $0x3e8] sm:$0xff] %v1974
    %2231 = vst [vmem:[#allocation7 + $0x3f0] sm:$0xff] %v1975
    %2232 = vst [vmem:[#allocation7 + $0x3f8] sm:$0xff] %v1976
    // Predicated region
    $region22: #{tpu_custom_call.1} parent=1 // pred_check
      _
    $region23: #{tpu_custom_call.1} parent=1 // pred_check_branch
      %2234 = sbr.rel (0) target = $region25
    $region24: #{tpu_custom_call.1} parent=1 // pred_region
      %s2236 = ssub.s32 16384, 16384
      %2237 = vsyncadd [#allocation4], %s2236
      %s2238 = sshll.u32 [#allocation7], 4
      %s2239 = int_to_ptr.vmem [resolvable:$true] %s2238
      %2244 = dma.vmem_to_hbm [thread:$0]  %s2239, 16384, %s3, [#allocation4], 128, 128, 8
    $region25: #{tpu_custom_call.1} parent=1 // pred_fallthru
      _
    // Predicated region
    $region26: #{tpu_custom_call.1} parent=1 // pred_check
      _
    $region27: #{tpu_custom_call.1} parent=1 // pred_check_branch
      %2246 = sbr.rel (0) target = $region29
    $region28: #{tpu_custom_call.1} parent=1 // pred_region
      %2247 = dma.done [#allocation4], 16384
    $region29: #{tpu_custom_call.1} parent=1 // pred_fallthru
      _
    %2248 = vsyncpa [#allocation3], 1
    %2249 = vsyncpa [#allocation6], 1
    %2250 = vsyncpa [#allocation4], 1

</llo_original>
